<compile_context>
chip_gen: v7x
topology: tpu7x:2x2x1
jax: 0.10.0
libtpu: 0.0.40
codegen_flags: <defaults>
</compile_context>

<pallas_src>
import math

import jax
import jax.numpy as jnp
from jax import lax
from jax.experimental import pallas as pl

# ----------------------------- configuration -----------------------------
B = 2            # batch size (cfg.batch_size)
C_IN = 4         # input channels (cfg.n_inputs)
L0 = 32          # sequence length (cfg.window_size)
DROPOUT_P = 0.0  # nn.Dropout(p=0.0) == identity -> elided in forward

K1, S1, C1 = 8, 2, 32
K2, S2, C2 = 6, 2, 64
K3, S3, C3 = 4, 1, 128
L1 = (L0 - K1) // S1 + 1          # 13
L2 = (L1 - K2) // S2 + 1          # 4
L3 = (L2 - K3) // S3 + 1          # 1  (so x.view(-1, f) rows == batch entries)
N_LIN1 = 32
N_OUT = 1
LANES = 128

# --- conv1/conv2 re-blocking (all static) ---
QUAD = S1 * S2                    # 4 input time-steps packed per LHS row for conv1
QCOLS = QUAD * C_IN               # 16 lanes per packed input row
LQ = L0 // QUAD                   # 8 packed input rows per batch
N_TAP1 = (K1 + S1 + QUAD - 1) // QUAD   # 3 shifted matmuls for conv1
PAIR = S2                         # 2 conv1 output positions packed per row
L1P = L2 + (K2 // S2) - 1         # 6 pair-rows of conv1 output consumed by conv2
N_TAP2 = K2 // S2                 # 3 shifted matmuls for conv2

# --- packed weight slab (bf16, lane-dense, matmul-ready [in, out] blocks) ---
W3_OFF = 0
W3_ROWS = K3 * C2                 # 256  (row order k*C2 + ci, 128 lanes)
W1Q_OFF = W3_OFF + W3_ROWS        # 256
W1Q_ROWS = N_TAP1 * QCOLS         # 48   (conv1 quad-tap blocks, 64 lanes: even|odd)
W2P_OFF = W1Q_OFF + W1Q_ROWS      # 304
W2P_ROWS = N_TAP2 * PAIR * C1     # 192  (conv2 tap-pair blocks, 64 lanes)
W4_OFF = W2P_OFF + W2P_ROWS       # 496
W4_ROWS = C3                      # 128  (lin1, 32 lanes used)
W_ROWS = W4_OFF + W4_ROWS         # 624


# ----------------------------- fused Pallas kernel -----------------------------
def _cnn5_fused_kernel(xq_ref, w_ref, bv_ref, o_ref):
    """Whole CNN_5 forward in one grid step; all intermediates live in vregs."""
    f32 = jnp.float32

    # biases / lin2 row vector (f32 slab, static slices)
    b1p = bv_ref[0:1, 0:PAIR * C1]     # conv1 bias, tiled for the (even|odd) packing
    b2 = bv_ref[1:2, 0:C2]
    b3 = bv_ref[2:3, 0:C3]
    b4 = bv_ref[3:4, 0:N_LIN1]
    b5 = bv_ref[4:5, 0:N_OUT]
    w5r = bv_ref[5:6, 0:N_LIN1]        # lin2 weight as a row vector (VPU path)

    def wblk(off, nrows, ncols):
        # bf16 storage -> f32 operands; accumulation is f32 via preferred_element_type.
        return w_ref[off:off + nrows, 0:ncols].astype(f32)

    y3_rows = []
    for bi in range(B):
        # ---- conv1 + ReLU: 3 shifted matmuls on quad-packed input rows ----
        # xq row (bi, q), lane t*C_IN+ci == x[bi, ci, 4q+t]; output y1p row m packs
        # conv1 positions (2m, 2m+1) in lanes (0:32, 32:64).
        acc1 = None
        for j in range(N_TAP1):
            xs = xq_ref[bi * LQ + j: bi * LQ + j + L1P, :]                    # [6, 16]
            d = jnp.dot(xs, wblk(W1Q_OFF + QCOLS * j, QCOLS, PAIR * C1),
                        preferred_element_type=f32)
            acc1 = d if acc1 is None else acc1 + d
        y1p = jnp.maximum(acc1 + b1p, 0.0)                                    # [6, 64]
        # (conv1 position 12 is never read by conv2 and is not materialized)
        # dropout(p=0.0) elided

        # ---- conv2 + ReLU: 3 shifted matmuls on the pair-packed rows ----
        acc2 = None
        for j in range(N_TAP2):
            ys = y1p[j:j + L2, :]                                             # [4, 64]
            d = jnp.dot(ys, wblk(W2P_OFF + PAIR * C1 * j, PAIR * C1, C2),
                        preferred_element_type=f32)
            acc2 = d if acc2 is None else acc2 + d
        y2 = jnp.maximum(acc2 + b2, 0.0)                                      # [4, 64]

        # ---- conv3 + ReLU (output length 1): per-tap single-row matmuls ----
        acc3 = None
        for k in range(K3):
            d = jnp.dot(y2[k:k + 1, :], wblk(W3_OFF + C2 * k, C2, C3),
                        preferred_element_type=f32)
            acc3 = d if acc3 is None else acc3 + d
        y3_rows.append(jnp.maximum(acc3 + b3, 0.0))                           # [1, 128]

    # x.view(-1, f): with L3 == 1 the rows are exactly the batch entries.
    y3 = jnp.concatenate(y3_rows, axis=0)                                     # [2, 128]

    # ---- lin1 + ReLU ----
    y4 = jnp.maximum(
        jnp.dot(y3, wblk(W4_OFF, C3, N_LIN1), preferred_element_type=f32) + b4,
        0.0)                                                                  # [2, 32]

    # ---- lin2 + ReLU: N=1 output -> VPU multiply + lane reduction (no MXU tail) ----
    y5 = jnp.maximum(jnp.sum(y4 * w5r, axis=-1, keepdims=True) + b5, 0.0)     # [2, 1]

    # lane-dense store; the wrapper reads lane 0.
    o_ref[...] = jnp.broadcast_to(y5, (B * L3, LANES)).astype(o_ref.dtype)


@jax.jit
def cnn5_forward(x, w_slab, bv_slab):
    # Time-major, 4 consecutive time-steps packed on the lane axis:
    #   xq[b*LQ + q, t*C_IN + ci] = x[b, ci, QUAD*q + t]   (pure layout plumbing)
    xq = jnp.transpose(x, (0, 2, 1)).reshape(B * LQ, QCOLS)
    out = pl.pallas_call(
        _cnn5_fused_kernel,
        out_shape=jax.ShapeDtypeStruct((B * L3, LANES), jnp.float32),
        grid=(1,),
        in_specs=[
            pl.BlockSpec((B * LQ, QCOLS), lambda i: (0, 0)),
            pl.BlockSpec((W_ROWS, LANES), lambda i: (0, 0)),
            pl.BlockSpec((8, LANES), lambda i: (0, 0)),
        ],
        out_specs=pl.BlockSpec((B * L3, LANES), lambda i: (0, 0)),
    )(xq, w_slab, bv_slab)
    return out[:, :N_OUT]


# ----------------------------- parameter construction -----------------------------
def init_params(key):
    """PyTorch-default-style uniform(-1/sqrt(fan_in), 1/sqrt(fan_in)) init.

    Conv/linear weights are rounded to bf16 once (so the bf16 slab and the f32
    reference use identical values), pre-transposed to matmul-ready [in, out]
    blocks, and packed into a single lane-dense bf16 slab.  Biases + the lin2 row
    stay f32 in a tiny (8, 128) slab.  All of this happens once, off the hot path.
    """
    def uni(k, shape, fan_in):
        bound = 1.0 / math.sqrt(fan_in)
        return jax.random.uniform(k, shape, jnp.float32, -bound, bound)

    ks = jax.random.split(key, 10)
    raw = dict(
        w1=uni(ks[0], (C1, C_IN, K1), C_IN * K1), b1=uni(ks[1], (C1,), C_IN * K1),
        w2=uni(ks[2], (C2, C1, K2), C1 * K2),     b2=uni(ks[3], (C2,), C1 * K2),
        w3=uni(ks[4], (C3, C2, K3), C2 * K3),     b3=uni(ks[5], (C3,), C2 * K3),
        w4=uni(ks[6], (N_LIN1, C3), C3),          b4=uni(ks[7], (N_LIN1,), C3),
        w5=uni(ks[8], (N_OUT, N_LIN1), N_LIN1),   b5=uni(ks[9], (N_OUT,), N_LIN1),
    )
    # Weights that live in the bf16 slab are made bf16-representable (exact in both
    # the kernel and the f32 reference).  w5 / biases stay full f32.
    for name in ('w1', 'w2', 'w3', 'w4'):
        raw[name] = raw[name].astype(jnp.bfloat16).astype(jnp.float32)

    # matmul-ready per-tap blocks: row (k, ci), col co, value W[co, ci, k]
    w1_kc = jnp.transpose(raw['w1'], (2, 1, 0))                     # (K1, C_IN, C1)
    w2_kc = jnp.transpose(raw['w2'], (2, 1, 0))                     # (K2, C1, C2)
    w3_2d = jnp.transpose(raw['w3'], (2, 1, 0)).reshape(K3 * C2, C3)
    w4_2d = raw['w4'].T                                             # (C3, N_LIN1)

    # conv1 quad-tap blocks: lanes 0:32 produce even output positions (taps 4j+t),
    # lanes 32:64 produce odd positions (taps 4j+t-2); out-of-range taps are zero.
    ztap = jnp.zeros((1, C_IN, C1), jnp.float32)
    span = N_TAP1 * QUAD
    w1_even = jnp.concatenate([w1_kc] + [ztap] * (span - K1), axis=0)
    w1_odd = jnp.concatenate([ztap] * S1 + [w1_kc] + [ztap] * (span - K1 - S1), axis=0)
    w1q_2d = jnp.concatenate(
        [w1_even.reshape(N_TAP1, QCOLS, C1), w1_odd.reshape(N_TAP1, QCOLS, C1)],
        axis=-1).reshape(W1Q_ROWS, PAIR * C1)                        # (48, 64)

    # conv2 tap-pair blocks: straight reshape groups taps (2j, 2j+1) per block.
    w2p_2d = w2_kc.reshape(W2P_ROWS, C2)                             # (192, 64)

    def pad_lanes(a):
        return jnp.pad(a, ((0, 0), (0, LANES - a.shape[1])))

    w_slab = jnp.concatenate(
        [w3_2d, pad_lanes(w1q_2d), pad_lanes(w2p_2d), pad_lanes(w4_2d)],
        axis=0).astype(jnp.bfloat16)
    assert w_slab.shape == (W_ROWS, LANES)

    bv = jnp.zeros((8, LANES), jnp.float32)
    bv = bv.at[0, 0:C1].set(raw['b1']).at[0, C1:2 * C1].set(raw['b1'])
    bv = bv.at[1, 0:C2].set(raw['b2'])
    bv = bv.at[2, 0:C3].set(raw['b3'])
    bv = bv.at[3, 0:N_LIN1].set(raw['b4'])
    bv = bv.at[4, 0:N_OUT].set(raw['b5'])
    bv = bv.at[5, 0:N_LIN1].set(raw['w5'][0])
    return raw, w_slab, bv


# ----------------------------- pure-JAX reference -----------------------------
def reference_forward(x, raw):
    hp = lax.Precision.HIGHEST  # true-f32 reference

    def conv_relu(h, w, bias, stride):
        y = lax.conv_general_dilated(h, w, (stride,), 'VALID',
                                     dimension_numbers=('NCH', 'OIH', 'NCH'),
                                     precision=hp)
        return jax.nn.relu(y + bias[None, :, None])

    h = conv_relu(x, raw['w1'], raw['b1'], S1)
    h = conv_relu(h, raw['w2'], raw['b2'], S2)
    h = conv_relu(h, raw['w3'], raw['b3'], S3)
    h = h.reshape(-1, C3)                        # x.view(-1, f); exact since L3 == 1
    h = jax.nn.relu(jnp.dot(h, raw['w4'].T, precision=hp) + raw['b4'])
    h = jax.nn.relu(jnp.dot(h, raw['w5'].T, precision=hp) + raw['b5'])
    return h


# ----------------------------- main -----------------------------
if __name__ == "__main__":
    assert L1 == 13 and L2 == 4 and L3 == 1
    assert L0 % QUAD == 0

    key = jax.random.PRNGKey(0)
    kx, kp = jax.random.split(key)
    x = jax.random.normal(kx, (B, C_IN, L0), dtype=jnp.float32)
    raw, w_slab, bv_slab = init_params(kp)

    out = jax.block_until_ready(cnn5_forward(x, w_slab, bv_slab))
    assert out.shape == (B * L3, N_OUT), out.shape

    ref = reference_forward(x, raw)
    # Tightened 100x vs the previous 1e-2 check (both paths use identical,
    # bf16-representable weights and f32 accumulation).
    assert bool(jnp.allclose(out, ref, rtol=1e-4, atol=1e-4)), (out, ref)
    print("KERNEL_OK")
</pallas_src>

<mosaic_0001>
module attributes {stable_mosaic.version = 11 : i64} {
  func.func @_cnn5_fused_kernel(%arg0: i32, %arg1: memref<16x16xf32, #tpu.memory_space<vmem>>, %arg2: memref<624x128xbf16, #tpu.memory_space<vmem>>, %arg3: memref<8x128xf32, #tpu.memory_space<vmem>>, %arg4: memref<2x128xf32, #tpu.memory_space<vmem>>) attributes {dimension_semantics = [#tpu.dimension_semantics<arbitrary>], iteration_bounds = array<i64: 1>, scalar_prefetch = 0 : i64, scratch_operands = 0 : i64, tpu.core_type = #tpu.core_type<tc>, window_params = [{pipeline_mode = #tpu.pipeline_mode<synchronous>, transform_indices = @transform_0, window_bounds = array<i64: 16, 16>}, {pipeline_mode = #tpu.pipeline_mode<synchronous>, transform_indices = @transform_1, window_bounds = array<i64: 624, 128>}, {pipeline_mode = #tpu.pipeline_mode<synchronous>, transform_indices = @transform_2, window_bounds = array<i64: 8, 128>}, {pipeline_mode = #tpu.pipeline_mode<synchronous>, transform_indices = @transform_3, window_bounds = array<i64: 2, 128>}]} {
    %c0 = arith.constant 0 : index
    %c0_0 = arith.constant 0 : index
    %0 = vector.load %arg3[%c0, %c0_0] : memref<8x128xf32, #tpu.memory_space<vmem>>, vector<1x64xf32>
    %c1 = arith.constant 1 : index
    %c0_1 = arith.constant 0 : index
    %1 = vector.load %arg3[%c1, %c0_1] : memref<8x128xf32, #tpu.memory_space<vmem>>, vector<1x64xf32>
    %c2 = arith.constant 2 : index
    %c0_2 = arith.constant 0 : index
    %2 = vector.load %arg3[%c2, %c0_2] : memref<8x128xf32, #tpu.memory_space<vmem>>, vector<1x128xf32>
    %c3 = arith.constant 3 : index
    %c0_3 = arith.constant 0 : index
    %3 = vector.load %arg3[%c3, %c0_3] : memref<8x128xf32, #tpu.memory_space<vmem>>, vector<1x32xf32>
    %c4 = arith.constant 4 : index
    %c0_4 = arith.constant 0 : index
    %4 = vector.load %arg3[%c4, %c0_4] : memref<8x128xf32, #tpu.memory_space<vmem>>, vector<1x1xf32>
    %c5 = arith.constant 5 : index
    %c0_5 = arith.constant 0 : index
    %5 = vector.load %arg3[%c5, %c0_5] : memref<8x128xf32, #tpu.memory_space<vmem>>, vector<1x32xf32>
    %c0_6 = arith.constant 0 : index
    %c0_7 = arith.constant 0 : index
    %6 = vector.load %arg1[%c0_6, %c0_7] : memref<16x16xf32, #tpu.memory_space<vmem>>, vector<6x16xf32>
    %c256 = arith.constant 256 : index
    %c0_8 = arith.constant 0 : index
    %7 = vector.load %arg2[%c256, %c0_8] : memref<624x128xbf16, #tpu.memory_space<vmem>>, vector<16x64xbf16>
    %8 = arith.extf %7 : vector<16x64xbf16> to vector<16x64xf32>
    %cst = arith.constant dense<0.000000e+00> : vector<6x64xf32>
    %9 = tpu.matmul %6, %8, %cst {dimension_numbers = #tpu.dot_dimension_numbers<[1], [0], [0], [1], [0, 0, 1, 1], [], []>} : vector<6x16xf32>, vector<16x64xf32>, vector<6x64xf32> -> vector<6x64xf32>
    %c1_9 = arith.constant 1 : index
    %c0_10 = arith.constant 0 : index
    %10 = vector.load %arg1[%c1_9, %c0_10] : memref<16x16xf32, #tpu.memory_space<vmem>>, vector<6x16xf32>
    %c272 = arith.constant 272 : index
    %c0_11 = arith.constant 0 : index
    %11 = vector.load %arg2[%c272, %c0_11] : memref<624x128xbf16, #tpu.memory_space<vmem>>, vector<16x64xbf16>
    %12 = arith.extf %11 : vector<16x64xbf16> to vector<16x64xf32>
    %cst_12 = arith.constant dense<0.000000e+00> : vector<6x64xf32>
    %13 = tpu.matmul %10, %12, %cst_12 {dimension_numbers = #tpu.dot_dimension_numbers<[1], [0], [0], [1], [0, 0, 1, 1], [], []>} : vector<6x16xf32>, vector<16x64xf32>, vector<6x64xf32> -> vector<6x64xf32>
    %14 = arith.addf %9, %13 : vector<6x64xf32>
    %c2_13 = arith.constant 2 : index
    %c0_14 = arith.constant 0 : index
    %15 = vector.load %arg1[%c2_13, %c0_14] : memref<16x16xf32, #tpu.memory_space<vmem>>, vector<6x16xf32>
    %c288 = arith.constant 288 : index
    %c0_15 = arith.constant 0 : index
    %16 = vector.load %arg2[%c288, %c0_15] : memref<624x128xbf16, #tpu.memory_space<vmem>>, vector<16x64xbf16>
    %17 = arith.extf %16 : vector<16x64xbf16> to vector<16x64xf32>
    %cst_16 = arith.constant dense<0.000000e+00> : vector<6x64xf32>
    %18 = tpu.matmul %15, %17, %cst_16 {dimension_numbers = #tpu.dot_dimension_numbers<[1], [0], [0], [1], [0, 0, 1, 1], [], []>} : vector<6x16xf32>, vector<16x64xf32>, vector<6x64xf32> -> vector<6x64xf32>
    %19 = arith.addf %14, %18 : vector<6x64xf32>
    %20 = vector.broadcast %0 : vector<1x64xf32> to vector<6x64xf32>
    %21 = arith.addf %19, %20 : vector<6x64xf32>
    %cst_17 = arith.constant 0.000000e+00 : f32
    %22 = vector.broadcast %cst_17 : f32 to vector<6x64xf32>
    %23 = arith.maximumf %21, %22 : vector<6x64xf32>
    %24 = vector.extract_strided_slice %23 {offsets = [0, 0], sizes = [4, 64], strides = [1, 1]} : vector<6x64xf32> to vector<4x64xf32>
    %c304 = arith.constant 304 : index
    %c0_18 = arith.constant 0 : index
    %25 = vector.load %arg2[%c304, %c0_18] : memref<624x128xbf16, #tpu.memory_space<vmem>>, vector<64x64xbf16>
    %26 = arith.extf %25 : vector<64x64xbf16> to vector<64x64xf32>
    %cst_19 = arith.constant dense<0.000000e+00> : vector<4x64xf32>
    %27 = tpu.matmul %24, %26, %cst_19 {dimension_numbers = #tpu.dot_dimension_numbers<[1], [0], [0], [1], [0, 0, 1, 1], [], []>} : vector<4x64xf32>, vector<64x64xf32>, vector<4x64xf32> -> vector<4x64xf32>
    %28 = vector.extract_strided_slice %23 {offsets = [1, 0], sizes = [4, 64], strides = [1, 1]} : vector<6x64xf32> to vector<4x64xf32>
    %c368 = arith.constant 368 : index
    %c0_20 = arith.constant 0 : index
    %29 = vector.load %arg2[%c368, %c0_20] : memref<624x128xbf16, #tpu.memory_space<vmem>>, vector<64x64xbf16>
    %30 = arith.extf %29 : vector<64x64xbf16> to vector<64x64xf32>
    %cst_21 = arith.constant dense<0.000000e+00> : vector<4x64xf32>
    %31 = tpu.matmul %28, %30, %cst_21 {dimension_numbers = #tpu.dot_dimension_numbers<[1], [0], [0], [1], [0, 0, 1, 1], [], []>} : vector<4x64xf32>, vector<64x64xf32>, vector<4x64xf32> -> vector<4x64xf32>
    %32 = arith.addf %27, %31 : vector<4x64xf32>
    %33 = vector.extract_strided_slice %23 {offsets = [2, 0], sizes = [4, 64], strides = [1, 1]} : vector<6x64xf32> to vector<4x64xf32>
    %c432 = arith.constant 432 : index
    %c0_22 = arith.constant 0 : index
    %34 = vector.load %arg2[%c432, %c0_22] : memref<624x128xbf16, #tpu.memory_space<vmem>>, vector<64x64xbf16>
    %35 = arith.extf %34 : vector<64x64xbf16> to vector<64x64xf32>
    %cst_23 = arith.constant dense<0.000000e+00> : vector<4x64xf32>
    %36 = tpu.matmul %33, %35, %cst_23 {dimension_numbers = #tpu.dot_dimension_numbers<[1], [0], [0], [1], [0, 0, 1, 1], [], []>} : vector<4x64xf32>, vector<64x64xf32>, vector<4x64xf32> -> vector<4x64xf32>
    %37 = arith.addf %32, %36 : vector<4x64xf32>
    %38 = vector.broadcast %1 : vector<1x64xf32> to vector<4x64xf32>
    %39 = arith.addf %37, %38 : vector<4x64xf32>
    %cst_24 = arith.constant 0.000000e+00 : f32
    %40 = vector.broadcast %cst_24 : f32 to vector<4x64xf32>
    %41 = arith.maximumf %39, %40 : vector<4x64xf32>
    %42 = vector.extract_strided_slice %41 {offsets = [0, 0], sizes = [1, 64], strides = [1, 1]} : vector<4x64xf32> to vector<1x64xf32>
    %c0_25 = arith.constant 0 : index
    %c0_26 = arith.constant 0 : index
    %43 = vector.load %arg2[%c0_25, %c0_26] : memref<624x128xbf16, #tpu.memory_space<vmem>>, vector<64x128xbf16>
    %44 = arith.extf %43 : vector<64x128xbf16> to vector<64x128xf32>
    %cst_27 = arith.constant dense<0.000000e+00> : vector<1x128xf32>
    %45 = tpu.matmul %42, %44, %cst_27 {dimension_numbers = #tpu.dot_dimension_numbers<[1], [0], [0], [1], [0, 0, 1, 1], [], []>} : vector<1x64xf32>, vector<64x128xf32>, vector<1x128xf32> -> vector<1x128xf32>
    %46 = vector.extract_strided_slice %41 {offsets = [1, 0], sizes = [1, 64], strides = [1, 1]} : vector<4x64xf32> to vector<1x64xf32>
    %c64 = arith.constant 64 : index
    %c0_28 = arith.constant 0 : index
    %47 = vector.load %arg2[%c64, %c0_28] : memref<624x128xbf16, #tpu.memory_space<vmem>>, vector<64x128xbf16>
    %48 = arith.extf %47 : vector<64x128xbf16> to vector<64x128xf32>
    %cst_29 = arith.constant dense<0.000000e+00> : vector<1x128xf32>
    %49 = tpu.matmul %46, %48, %cst_29 {dimension_numbers = #tpu.dot_dimension_numbers<[1], [0], [0], [1], [0, 0, 1, 1], [], []>} : vector<1x64xf32>, vector<64x128xf32>, vector<1x128xf32> -> vector<1x128xf32>
    %50 = arith.addf %45, %49 : vector<1x128xf32>
    %51 = vector.extract_strided_slice %41 {offsets = [2, 0], sizes = [1, 64], strides = [1, 1]} : vector<4x64xf32> to vector<1x64xf32>
    %c128 = arith.constant 128 : index
    %c0_30 = arith.constant 0 : index
    %52 = vector.load %arg2[%c128, %c0_30] : memref<624x128xbf16, #tpu.memory_space<vmem>>, vector<64x128xbf16>
    %53 = arith.extf %52 : vector<64x128xbf16> to vector<64x128xf32>
    %cst_31 = arith.constant dense<0.000000e+00> : vector<1x128xf32>
    %54 = tpu.matmul %51, %53, %cst_31 {dimension_numbers = #tpu.dot_dimension_numbers<[1], [0], [0], [1], [0, 0, 1, 1], [], []>} : vector<1x64xf32>, vector<64x128xf32>, vector<1x128xf32> -> vector<1x128xf32>
    %55 = arith.addf %50, %54 : vector<1x128xf32>
    %56 = vector.extract_strided_slice %41 {offsets = [3, 0], sizes = [1, 64], strides = [1, 1]} : vector<4x64xf32> to vector<1x64xf32>
    %c192 = arith.constant 192 : index
    %c0_32 = arith.constant 0 : index
    %57 = vector.load %arg2[%c192, %c0_32] : memref<624x128xbf16, #tpu.memory_space<vmem>>, vector<64x128xbf16>
    %58 = arith.extf %57 : vector<64x128xbf16> to vector<64x128xf32>
    %cst_33 = arith.constant dense<0.000000e+00> : vector<1x128xf32>
    %59 = tpu.matmul %56, %58, %cst_33 {dimension_numbers = #tpu.dot_dimension_numbers<[1], [0], [0], [1], [0, 0, 1, 1], [], []>} : vector<1x64xf32>, vector<64x128xf32>, vector<1x128xf32> -> vector<1x128xf32>
    %60 = arith.addf %55, %59 : vector<1x128xf32>
    %61 = arith.addf %60, %2 : vector<1x128xf32>
    %cst_34 = arith.constant 0.000000e+00 : f32
    %62 = vector.broadcast %cst_34 : f32 to vector<1x128xf32>
    %63 = arith.maximumf %61, %62 : vector<1x128xf32>
    %c8 = arith.constant 8 : index
    %c0_35 = arith.constant 0 : index
    %64 = vector.load %arg1[%c8, %c0_35] : memref<16x16xf32, #tpu.memory_space<vmem>>, vector<6x16xf32>
    %c256_36 = arith.constant 256 : index
    %c0_37 = arith.constant 0 : index
    %65 = vector.load %arg2[%c256_36, %c0_37] : memref<624x128xbf16, #tpu.memory_space<vmem>>, vector<16x64xbf16>
    %66 = arith.extf %65 : vector<16x64xbf16> to vector<16x64xf32>
    %cst_38 = arith.constant dense<0.000000e+00> : vector<6x64xf32>
    %67 = tpu.matmul %64, %66, %cst_38 {dimension_numbers = #tpu.dot_dimension_numbers<[1], [0], [0], [1], [0, 0, 1, 1], [], []>} : vector<6x16xf32>, vector<16x64xf32>, vector<6x64xf32> -> vector<6x64xf32>
    %c9 = arith.constant 9 : index
    %c0_39 = arith.constant 0 : index
    %68 = vector.load %arg1[%c9, %c0_39] : memref<16x16xf32, #tpu.memory_space<vmem>>, vector<6x16xf32>
    %c272_40 = arith.constant 272 : index
    %c0_41 = arith.constant 0 : index
    %69 = vector.load %arg2[%c272_40, %c0_41] : memref<624x128xbf16, #tpu.memory_space<vmem>>, vector<16x64xbf16>
    %70 = arith.extf %69 : vector<16x64xbf16> to vector<16x64xf32>
    %cst_42 = arith.constant dense<0.000000e+00> : vector<6x64xf32>
    %71 = tpu.matmul %68, %70, %cst_42 {dimension_numbers = #tpu.dot_dimension_numbers<[1], [0], [0], [1], [0, 0, 1, 1], [], []>} : vector<6x16xf32>, vector<16x64xf32>, vector<6x64xf32> -> vector<6x64xf32>
    %72 = arith.addf %67, %71 : vector<6x64xf32>
    %c10 = arith.constant 10 : index
    %c0_43 = arith.constant 0 : index
    %73 = vector.load %arg1[%c10, %c0_43] : memref<16x16xf32, #tpu.memory_space<vmem>>, vector<6x16xf32>
    %c288_44 = arith.constant 288 : index
    %c0_45 = arith.constant 0 : index
    %74 = vector.load %arg2[%c288_44, %c0_45] : memref<624x128xbf16, #tpu.memory_space<vmem>>, vector<16x64xbf16>
    %75 = arith.extf %74 : vector<16x64xbf16> to vector<16x64xf32>
    %cst_46 = arith.constant dense<0.000000e+00> : vector<6x64xf32>
    %76 = tpu.matmul %73, %75, %cst_46 {dimension_numbers = #tpu.dot_dimension_numbers<[1], [0], [0], [1], [0, 0, 1, 1], [], []>} : vector<6x16xf32>, vector<16x64xf32>, vector<6x64xf32> -> vector<6x64xf32>
    %77 = arith.addf %72, %76 : vector<6x64xf32>
    %78 = vector.broadcast %0 : vector<1x64xf32> to vector<6x64xf32>
    %79 = arith.addf %77, %78 : vector<6x64xf32>
    %cst_47 = arith.constant 0.000000e+00 : f32
    %80 = vector.broadcast %cst_47 : f32 to vector<6x64xf32>
    %81 = arith.maximumf %79, %80 : vector<6x64xf32>
    %82 = vector.extract_strided_slice %81 {offsets = [0, 0], sizes = [4, 64], strides = [1, 1]} : vector<6x64xf32> to vector<4x64xf32>
    %c304_48 = arith.constant 304 : index
    %c0_49 = arith.constant 0 : index
    %83 = vector.load %arg2[%c304_48, %c0_49] : memref<624x128xbf16, #tpu.memory_space<vmem>>, vector<64x64xbf16>
    %84 = arith.extf %83 : vector<64x64xbf16> to vector<64x64xf32>
    %cst_50 = arith.constant dense<0.000000e+00> : vector<4x64xf32>
    %85 = tpu.matmul %82, %84, %cst_50 {dimension_numbers = #tpu.dot_dimension_numbers<[1], [0], [0], [1], [0, 0, 1, 1], [], []>} : vector<4x64xf32>, vector<64x64xf32>, vector<4x64xf32> -> vector<4x64xf32>
    %86 = vector.extract_strided_slice %81 {offsets = [1, 0], sizes = [4, 64], strides = [1, 1]} : vector<6x64xf32> to vector<4x64xf32>
    %c368_51 = arith.constant 368 : index
    %c0_52 = arith.constant 0 : index
    %87 = vector.load %arg2[%c368_51, %c0_52] : memref<624x128xbf16, #tpu.memory_space<vmem>>, vector<64x64xbf16>
    %88 = arith.extf %87 : vector<64x64xbf16> to vector<64x64xf32>
    %cst_53 = arith.constant dense<0.000000e+00> : vector<4x64xf32>
    %89 = tpu.matmul %86, %88, %cst_53 {dimension_numbers = #tpu.dot_dimension_numbers<[1], [0], [0], [1], [0, 0, 1, 1], [], []>} : vector<4x64xf32>, vector<64x64xf32>, vector<4x64xf32> -> vector<4x64xf32>
    %90 = arith.addf %85, %89 : vector<4x64xf32>
    %91 = vector.extract_strided_slice %81 {offsets = [2, 0], sizes = [4, 64], strides = [1, 1]} : vector<6x64xf32> to vector<4x64xf32>
    %c432_54 = arith.constant 432 : index
    %c0_55 = arith.constant 0 : index
    %92 = vector.load %arg2[%c432_54, %c0_55] : memref<624x128xbf16, #tpu.memory_space<vmem>>, vector<64x64xbf16>
    %93 = arith.extf %92 : vector<64x64xbf16> to vector<64x64xf32>
    %cst_56 = arith.constant dense<0.000000e+00> : vector<4x64xf32>
    %94 = tpu.matmul %91, %93, %cst_56 {dimension_numbers = #tpu.dot_dimension_numbers<[1], [0], [0], [1], [0, 0, 1, 1], [], []>} : vector<4x64xf32>, vector<64x64xf32>, vector<4x64xf32> -> vector<4x64xf32>
    %95 = arith.addf %90, %94 : vector<4x64xf32>
    %96 = vector.broadcast %1 : vector<1x64xf32> to vector<4x64xf32>
    %97 = arith.addf %95, %96 : vector<4x64xf32>
    %cst_57 = arith.constant 0.000000e+00 : f32
    %98 = vector.broadcast %cst_57 : f32 to vector<4x64xf32>
    %99 = arith.maximumf %97, %98 : vector<4x64xf32>
    %100 = vector.extract_strided_slice %99 {offsets = [0, 0], sizes = [1, 64], strides = [1, 1]} : vector<4x64xf32> to vector<1x64xf32>
    %c0_58 = arith.constant 0 : index
    %c0_59 = arith.constant 0 : index
    %101 = vector.load %arg2[%c0_58, %c0_59] : memref<624x128xbf16, #tpu.memory_space<vmem>>, vector<64x128xbf16>
    %102 = arith.extf %101 : vector<64x128xbf16> to vector<64x128xf32>
    %cst_60 = arith.constant dense<0.000000e+00> : vector<1x128xf32>
    %103 = tpu.matmul %100, %102, %cst_60 {dimension_numbers = #tpu.dot_dimension_numbers<[1], [0], [0], [1], [0, 0, 1, 1], [], []>} : vector<1x64xf32>, vector<64x128xf32>, vector<1x128xf32> -> vector<1x128xf32>
    %104 = vector.extract_strided_slice %99 {offsets = [1, 0], sizes = [1, 64], strides = [1, 1]} : vector<4x64xf32> to vector<1x64xf32>
    %c64_61 = arith.constant 64 : index
    %c0_62 = arith.constant 0 : index
    %105 = vector.load %arg2[%c64_61, %c0_62] : memref<624x128xbf16, #tpu.memory_space<vmem>>, vector<64x128xbf16>
    %106 = arith.extf %105 : vector<64x128xbf16> to vector<64x128xf32>
    %cst_63 = arith.constant dense<0.000000e+00> : vector<1x128xf32>
    %107 = tpu.matmul %104, %106, %cst_63 {dimension_numbers = #tpu.dot_dimension_numbers<[1], [0], [0], [1], [0, 0, 1, 1], [], []>} : vector<1x64xf32>, vector<64x128xf32>, vector<1x128xf32> -> vector<1x128xf32>
    %108 = arith.addf %103, %107 : vector<1x128xf32>
    %109 = vector.extract_strided_slice %99 {offsets = [2, 0], sizes = [1, 64], strides = [1, 1]} : vector<4x64xf32> to vector<1x64xf32>
    %c128_64 = arith.constant 128 : index
    %c0_65 = arith.constant 0 : index
    %110 = vector.load %arg2[%c128_64, %c0_65] : memref<624x128xbf16, #tpu.memory_space<vmem>>, vector<64x128xbf16>
    %111 = arith.extf %110 : vector<64x128xbf16> to vector<64x128xf32>
    %cst_66 = arith.constant dense<0.000000e+00> : vector<1x128xf32>
    %112 = tpu.matmul %109, %111, %cst_66 {dimension_numbers = #tpu.dot_dimension_numbers<[1], [0], [0], [1], [0, 0, 1, 1], [], []>} : vector<1x64xf32>, vector<64x128xf32>, vector<1x128xf32> -> vector<1x128xf32>
    %113 = arith.addf %108, %112 : vector<1x128xf32>
    %114 = vector.extract_strided_slice %99 {offsets = [3, 0], sizes = [1, 64], strides = [1, 1]} : vector<4x64xf32> to vector<1x64xf32>
    %c192_67 = arith.constant 192 : index
    %c0_68 = arith.constant 0 : index
    %115 = vector.load %arg2[%c192_67, %c0_68] : memref<624x128xbf16, #tpu.memory_space<vmem>>, vector<64x128xbf16>
    %116 = arith.extf %115 : vector<64x128xbf16> to vector<64x128xf32>
    %cst_69 = arith.constant dense<0.000000e+00> : vector<1x128xf32>
    %117 = tpu.matmul %114, %116, %cst_69 {dimension_numbers = #tpu.dot_dimension_numbers<[1], [0], [0], [1], [0, 0, 1, 1], [], []>} : vector<1x64xf32>, vector<64x128xf32>, vector<1x128xf32> -> vector<1x128xf32>
    %118 = arith.addf %113, %117 : vector<1x128xf32>
    %119 = arith.addf %118, %2 : vector<1x128xf32>
    %cst_70 = arith.constant 0.000000e+00 : f32
    %120 = vector.broadcast %cst_70 : f32 to vector<1x128xf32>
    %121 = arith.maximumf %119, %120 : vector<1x128xf32>
    %122 = tpu.concatenate %63, %121 in 0 : vector<1x128xf32>, vector<1x128xf32> -> vector<2x128xf32>
    %c496 = arith.constant 496 : index
    %c0_71 = arith.constant 0 : index
    %123 = vector.load %arg2[%c496, %c0_71] : memref<624x128xbf16, #tpu.memory_space<vmem>>, vector<128x32xbf16>
    %124 = arith.extf %123 : vector<128x32xbf16> to vector<128x32xf32>
    %cst_72 = arith.constant dense<0.000000e+00> : vector<2x32xf32>
    %125 = tpu.matmul %122, %124, %cst_72 {dimension_numbers = #tpu.dot_dimension_numbers<[1], [0], [0], [1], [0, 0, 1, 1], [], []>} : vector<2x128xf32>, vector<128x32xf32>, vector<2x32xf32> -> vector<2x32xf32>
    %126 = vector.broadcast %3 : vector<1x32xf32> to vector<2x32xf32>
    %127 = arith.addf %125, %126 : vector<2x32xf32>
    %cst_73 = arith.constant 0.000000e+00 : f32
    %128 = vector.broadcast %cst_73 : f32 to vector<2x32xf32>
    %129 = arith.maximumf %127, %128 : vector<2x32xf32>
    %130 = vector.broadcast %5 : vector<1x32xf32> to vector<2x32xf32>
    %131 = arith.mulf %129, %130 : vector<2x32xf32>
    %cst_74 = arith.constant dense<0.000000e+00> : vector<2xf32>
    %132 = vector.multi_reduction <add>, %131, %cst_74 [1] : vector<2x32xf32> to vector<2xf32>
    %133 = vector.shape_cast %132 : vector<2xf32> to vector<2x1xf32>
    %134 = vector.broadcast %4 : vector<1x1xf32> to vector<2x1xf32>
    %135 = arith.addf %133, %134 : vector<2x1xf32>
    %cst_75 = arith.constant 0.000000e+00 : f32
    %136 = vector.broadcast %cst_75 : f32 to vector<2x1xf32>
    %137 = arith.maximumf %135, %136 : vector<2x1xf32>
    %138 = vector.shape_cast %137 : vector<2x1xf32> to vector<2x1xf32>
    %139 = vector.broadcast %138 : vector<2x1xf32> to vector<2x128xf32>
    %c0_76 = arith.constant 0 : index
    %c0_77 = arith.constant 0 : index
    %140 = vector.load %arg4[%c0_76, %c0_77] : memref<2x128xf32, #tpu.memory_space<vmem>>, vector<2x128xf32>
    tpu.vector_store %arg4[%c0_76, %c0_77], %139 {strides = array<i32>} : memref<2x128xf32, #tpu.memory_space<vmem>>, vector<2x128xf32>,
    return
  }
  func.func @transform_0(%arg0: i32) -> (i32, i32) {
    %c0_i32 = arith.constant 0 : i32
    %c0_i32_0 = arith.constant 0 : i32
    %c0_i32_1 = arith.constant 0 : i32
    return %c0_i32, %c0_i32_0 : i32, i32
  }
  func.func @transform_1(%arg0: i32) -> (i32, i32) {
    %c0_i32 = arith.constant 0 : i32
    %c0_i32_0 = arith.constant 0 : i32
    %c0_i32_1 = arith.constant 0 : i32
    return %c0_i32, %c0_i32_0 : i32, i32
  }
  func.func @transform_2(%arg0: i32) -> (i32, i32) {
    %c0_i32 = arith.constant 0 : i32
    %c0_i32_0 = arith.constant 0 : i32
    %c0_i32_1 = arith.constant 0 : i32
    return %c0_i32, %c0_i32_0 : i32, i32
  }
  func.func @transform_3(%arg0: i32) -> (i32, i32) {
    %c0_i32 = arith.constant 0 : i32
    %c0_i32_0 = arith.constant 0 : i32
    %c0_i32_1 = arith.constant 0 : i32
    return %c0_i32, %c0_i32_0 : i32, i32
  }
}

</mosaic_0001>

<llo_original>
// kernel: cnn5_forward.1
$region0: #{cnn5_forward.1}
  #allocation0 [shape = 'u32[]', space=smem, size = 0x4, offset = 0x4, fixed_abs, tag = 'smem constant byte address 0x4 - core index']
  #allocation1 [shape = 'u32[144,128]{1,0:T(1,128)}', space=vmem, size = 0x12000, scoped, tag = 'internal scratch']
  %s0 = inlined_call_operand.vmem [shape: f32[16,16], index: 0, kind: input, shape index: {}]
  %s1 = inlined_call_operand.hbm [shape: bf16[624,128], index: 1, kind: input, shape index: {}]
  %s2 = inlined_call_operand.vmem [shape: f32[8,128], index: 2, kind: input, shape index: {}]
  %s3 = inlined_call_operand.vmem [shape: f32[2,128], index: 3, kind: output, shape index: {}]
  %s4 = sld [smem:[#allocation0]]
  $region26: #{cnn5_forward.1} parent=0
    _
  %s6 = ssub.s32 1, %s4
  %s7 = scalar_select 0, %s6, %s4
  $region1: #{cnn5_forward.1} parent=0
    #allocation2 [shape = 'u8[159744]{0}', space=vmem, size = 0x27000, scoped, tag = 'input window, operand 1, single buffered']
    #allocation3 [shape = 's32[1]{0}', space=sflag, size = 0x4, scoped, tag = 'scoped memory for cnn5_forward.1']
    %8 = vsyncpa [#allocation3], 0
    // Predicated region
    $region2: #{cnn5_forward.1} parent=1 // pred_check
      _
    $region3: #{cnn5_forward.1} parent=1 // pred_check_branch
      %10 = sbr.rel (0) target = $region5
    $region4: #{cnn5_forward.1} parent=1 // pred_region
      _
    $region5: #{cnn5_forward.1} parent=1 // pred_fallthru
      _
    // Predicated region
    $region6: #{cnn5_forward.1} parent=1 // pred_check
      _
    $region7: #{cnn5_forward.1} parent=1 // pred_check_branch
      %12 = sbr.rel (0) target = $region9
    $region8: #{cnn5_forward.1} parent=1 // pred_region
      %s14 = ssub.s32 4992, 4992
      %15 = vsyncadd [#allocation3], %s14
      %s16 = sshll.u32 [#allocation2], 4
      %s17 = int_to_ptr.vmem [resolvable:$true] %s16
      %22 = dma.hbm_to_vmem [thread:$0]  %s1, 4992, %s17, [#allocation3], 64, 64, 4
    $region9: #{cnn5_forward.1} parent=1 // pred_fallthru
      _
    // Predicated region
    $region10: #{cnn5_forward.1} parent=1 // pred_check
      _
    $region11: #{cnn5_forward.1} parent=1 // pred_check_branch
      %24 = sbr.rel (0) target = $region13
    $region12: #{cnn5_forward.1} parent=1 // pred_region
      _
    $region13: #{cnn5_forward.1} parent=1 // pred_fallthru
      _
    // Predicated region
    $region14: #{cnn5_forward.1} parent=1 // pred_check
      _
    $region15: #{cnn5_forward.1} parent=1 // pred_check_branch
      %26 = sbr.rel (0) target = $region17
    $region16: #{cnn5_forward.1} parent=1 // pred_region
      %27 = dma.done [#allocation3], 4992
    $region17: #{cnn5_forward.1} parent=1 // pred_fallthru
      _
    %v28 = vld [vmem:[%s2] sm:$0x1]
    %v29 = vld [vmem:[%s2 + $0x1] sm:$0x1]
    %v30 = vld [vmem:[%s2 + $0x2] sm:$0x1]
    %v31 = vld [vmem:[%s2 + $0x3] sm:$0x1]
    %v32 = vld [vmem:[%s2 + $0x4] sm:$0x1]
    %v33 = vld [vmem:[%s2 + $0x5] sm:$0x1]
    %v34 = vld [vmem:[%s0] sm:$0x3f]
    %v35 = vld [vmem:[#allocation2 + $0x80] sm:$0xf]
    %v36 = vld [vmem:[#allocation2 + $0x84] sm:$0xf]
    %v37 = vunpack.c.l.bf16 %v35
    %v38 = vunpack.c.l.bf16 %v36
    %v39 = vld [vmem:[%s0 + $0x1] sm:$0x3f]
    %v40 = vld [vmem:[#allocation2 + $0x88] sm:$0xf]
    %v41 = vld [vmem:[#allocation2 + $0x8c] sm:$0xf]
    %v42 = vunpack.c.l.bf16 %v40
    %v43 = vunpack.c.l.bf16 %v41
    %vm44 = vcmask 130048
    %v46 = vsel %vm44, %v39, 0
    %48 = vmatprep.subr.mxu0 0.0
    %49 = vmatpush1.msra.mxu0 %v42
    %50 = vmatprep.subr.mxu0 0.0
    %51 = vmatpush1.msra.mxu0 %v43
    %52 = vmatprep.subr.mxu0 0.0
    %53 = vmatpush1.msra.mxu0 0.0
    %54 = vmatprep.subr.mxu0 0.0
    %55 = vmatpush1.msra.mxu0 0.0
    %56 = vmatprep.subr.mxu0 0.0
    %57 = vmatpush1.msra.mxu0 0.0
    %58 = vmatprep.subr.mxu0 0.0
    %59 = vmatpush1.msra.mxu0 0.0
    %60 = vmatprep.subr.mxu0 0.0
    %61 = vmatpush1.msra.mxu0 0.0
    %62 = vmatprep.subr.mxu0 0.0
    %63 = vmatpush1.msra.mxu0 0.0
    %64 = vmatprep.subr.mxu0 0.0
    %65 = vmatpush1.msra.mxu0 0.0
    %66 = vmatprep.subr.mxu0 0.0
    %67 = vmatpush1.msra.mxu0 0.0
    %68 = vmatprep.subr.mxu0 0.0
    %69 = vmatpush1.msra.mxu0 0.0
    %70 = vmatprep.subr.mxu0 0.0
    %71 = vmatpush1.msra.mxu0 0.0
    %72 = vmatprep.subr.mxu0 0.0
    %73 = vmatpush1.msra.mxu0 0.0
    %74 = vmatprep.subr.mxu0 0.0
    %75 = vmatpush1.msra.mxu0 0.0
    %76 = vmatprep.subr.mxu0 0.0
    %77 = vmatpush1.msra.mxu0 0.0
    %78 = vmatprep.subr.mxu0 0.0
    %79 = vmatpush1.msra.mxu0 0.0
    %80 = vmatprep.subr.mxu0 0.0
    %81 = vmatpush1.msra.mxu0 0.0
    %82 = vmatprep.subr.mxu0 0.0
    %83 = vmatpush1.msra.mxu0 0.0
    %84 = vmatprep.subr.mxu0 0.0
    %85 = vmatpush1.msra.mxu0 0.0
    %86 = vmatprep.subr.mxu0 0.0
    %87 = vmatpush1.msra.mxu0 0.0
    %88 = vmatprep.subr.mxu0 0.0
    %89 = vmatpush1.msra.mxu0 0.0
    %90 = vmatprep.subr.mxu0 0.0
    %91 = vmatpush1.msra.mxu0 0.0
    %92 = vmatprep.subr.mxu0 0.0
    %93 = vmatpush1.msra.mxu0 0.0
    %94 = vmatprep.subr.mxu0 0.0
    %95 = vmatpush1.msra.mxu0 0.0
    %96 = vmatprep.subr.mxu0 0.0
    %97 = vmatpush1.msra.mxu0 0.0
    %98 = vmatprep.subr.mxu0 0.0
    %99 = vmatpush1.msra.mxu0 0.0
    %100 = vmatprep.subr.mxu0 0.0
    %101 = vmatpush1.msra.mxu0 0.0
    %102 = vmatprep.subr.mxu0 0.0
    %103 = vmatpush1.msra.mxu0 0.0
    %104 = vmatprep.subr.mxu0 0.0
    %105 = vmatpush1.msra.mxu0 0.0
    %106 = vmatprep.subr.mxu0 0.0
    %107 = vmatpush1.msra.mxu0 0.0
    %108 = vmatprep.subr.mxu0 0.0
    %109 = vmatpush1.msra.mxu0 0.0
    %110 = vmatprep.subr.mxu0 0.0
    %111 = vmatpush1.msra.mxu0 0.0
    %112 = vmatprep.mubr.f32.mxu0 0.0
    %113 = vmatmul.mubr.f32.gmra.mrb[0].mxu0 %v46
    %v114 = vpop.f32.mrb[0].mxu0
    %v115 = vadd.f32 0.0, %v114
    %v116 = vpop.f32.mrb[0].mxu0
    %117 = vdwg.mxu0
    %v119 = vsel %vm44, %v34, 0
    %121 = vmatprep.subr.mxu0 0.0
    %122 = vmatpush1.msra.mxu0 %v37
    %123 = vmatprep.subr.mxu0 0.0
    %124 = vmatpush1.msra.mxu0 %v38
    %125 = vmatprep.subr.mxu0 0.0
    %126 = vmatpush1.msra.mxu0 0.0
    %127 = vmatprep.subr.mxu0 0.0
    %128 = vmatpush1.msra.mxu0 0.0
    %129 = vmatprep.subr.mxu0 0.0
    %130 = vmatpush1.msra.mxu0 0.0
    %131 = vmatprep.subr.mxu0 0.0
    %132 = vmatpush1.msra.mxu0 0.0
    %133 = vmatprep.subr.mxu0 0.0
    %134 = vmatpush1.msra.mxu0 0.0
    %135 = vmatprep.subr.mxu0 0.0
    %136 = vmatpush1.msra.mxu0 0.0
    %137 = vmatprep.subr.mxu0 0.0
    %138 = vmatpush1.msra.mxu0 0.0
    %139 = vmatprep.subr.mxu0 0.0
    %140 = vmatpush1.msra.mxu0 0.0
    %141 = vmatprep.subr.mxu0 0.0
    %142 = vmatpush1.msra.mxu0 0.0
    %143 = vmatprep.subr.mxu0 0.0
    %144 = vmatpush1.msra.mxu0 0.0
    %145 = vmatprep.subr.mxu0 0.0
    %146 = vmatpush1.msra.mxu0 0.0
    %147 = vmatprep.subr.mxu0 0.0
    %148 = vmatpush1.msra.mxu0 0.0
    %149 = vmatprep.subr.mxu0 0.0
    %150 = vmatpush1.msra.mxu0 0.0
    %151 = vmatprep.subr.mxu0 0.0
    %152 = vmatpush1.msra.mxu0 0.0
    %153 = vmatprep.subr.mxu0 0.0
    %154 = vmatpush1.msra.mxu0 0.0
    %155 = vmatprep.subr.mxu0 0.0
    %156 = vmatpush1.msra.mxu0 0.0
    %157 = vmatprep.subr.mxu0 0.0
    %158 = vmatpush1.msra.mxu0 0.0
    %159 = vmatprep.subr.mxu0 0.0
    %160 = vmatpush1.msra.mxu0 0.0
    %161 = vmatprep.subr.mxu0 0.0
    %162 = vmatpush1.msra.mxu0 0.0
    %163 = vmatprep.subr.mxu0 0.0
    %164 = vmatpush1.msra.mxu0 0.0
    %165 = vmatprep.subr.mxu0 0.0
    %166 = vmatpush1.msra.mxu0 0.0
    %167 = vmatprep.subr.mxu0 0.0
    %168 = vmatpush1.msra.mxu0 0.0
    %169 = vmatprep.subr.mxu0 0.0
    %170 = vmatpush1.msra.mxu0 0.0
    %171 = vmatprep.subr.mxu0 0.0
    %172 = vmatpush1.msra.mxu0 0.0
    %173 = vmatprep.subr.mxu0 0.0
    %174 = vmatpush1.msra.mxu0 0.0
    %175 = vmatprep.subr.mxu0 0.0
    %176 = vmatpush1.msra.mxu0 0.0
    %177 = vmatprep.subr.mxu0 0.0
    %178 = vmatpush1.msra.mxu0 0.0
    %179 = vmatprep.subr.mxu0 0.0
    %180 = vmatpush1.msra.mxu0 0.0
    %181 = vmatprep.subr.mxu0 0.0
    %182 = vmatpush1.msra.mxu0 0.0
    %183 = vmatprep.subr.mxu0 0.0
    %184 = vmatpush1.msra.mxu0 0.0
    %185 = vmatprep.mubr.f32.mxu0 0.0
    %186 = vmatmul.mubr.f32.gmra.mrb[0].mxu0 %v119
    %v187 = vpop.f32.mrb[0].mxu0
    %v188 = vadd.f32 %v115, %v187
    %v189 = vpop.f32.mrb[0].mxu0
    %190 = vdwg.mxu0
    %v191 = vld [vmem:[%s0 + $0x2] sm:$0x3f]
    %v192 = vld [vmem:[#allocation2 + $0x90] sm:$0xf]
    %v193 = vld [vmem:[#allocation2 + $0x94] sm:$0xf]
    %v194 = vunpack.c.l.bf16 %v192
    %v195 = vunpack.c.l.bf16 %v193
    %v197 = vsel %vm44, %v191, 0
    %199 = vmatprep.subr.mxu0 0.0
    %200 = vmatpush1.msra.mxu0 %v194
    %201 = vmatprep.subr.mxu0 0.0
    %202 = vmatpush1.msra.mxu0 %v195
    %203 = vmatprep.subr.mxu0 0.0
    %204 = vmatpush1.msra.mxu0 0.0
    %205 = vmatprep.subr.mxu0 0.0
    %206 = vmatpush1.msra.mxu0 0.0
    %207 = vmatprep.subr.mxu0 0.0
    %208 = vmatpush1.msra.mxu0 0.0
    %209 = vmatprep.subr.mxu0 0.0
    %210 = vmatpush1.msra.mxu0 0.0
    %211 = vmatprep.subr.mxu0 0.0
    %212 = vmatpush1.msra.mxu0 0.0
    %213 = vmatprep.subr.mxu0 0.0
    %214 = vmatpush1.msra.mxu0 0.0
    %215 = vmatprep.subr.mxu0 0.0
    %216 = vmatpush1.msra.mxu0 0.0
    %217 = vmatprep.subr.mxu0 0.0
    %218 = vmatpush1.msra.mxu0 0.0
    %219 = vmatprep.subr.mxu0 0.0
    %220 = vmatpush1.msra.mxu0 0.0
    %221 = vmatprep.subr.mxu0 0.0
    %222 = vmatpush1.msra.mxu0 0.0
    %223 = vmatprep.subr.mxu0 0.0
    %224 = vmatpush1.msra.mxu0 0.0
    %225 = vmatprep.subr.mxu0 0.0
    %226 = vmatpush1.msra.mxu0 0.0
    %227 = vmatprep.subr.mxu0 0.0
    %228 = vmatpush1.msra.mxu0 0.0
    %229 = vmatprep.subr.mxu0 0.0
    %230 = vmatpush1.msra.mxu0 0.0
    %231 = vmatprep.subr.mxu0 0.0
    %232 = vmatpush1.msra.mxu0 0.0
    %233 = vmatprep.subr.mxu0 0.0
    %234 = vmatpush1.msra.mxu0 0.0
    %235 = vmatprep.subr.mxu0 0.0
    %236 = vmatpush1.msra.mxu0 0.0
    %237 = vmatprep.subr.mxu0 0.0
    %238 = vmatpush1.msra.mxu0 0.0
    %239 = vmatprep.subr.mxu0 0.0
    %240 = vmatpush1.msra.mxu0 0.0
    %241 = vmatprep.subr.mxu0 0.0
    %242 = vmatpush1.msra.mxu0 0.0
    %243 = vmatprep.subr.mxu0 0.0
    %244 = vmatpush1.msra.mxu0 0.0
    %245 = vmatprep.subr.mxu0 0.0
    %246 = vmatpush1.msra.mxu0 0.0
    %247 = vmatprep.subr.mxu0 0.0
    %248 = vmatpush1.msra.mxu0 0.0
    %249 = vmatprep.subr.mxu0 0.0
    %250 = vmatpush1.msra.mxu0 0.0
    %251 = vmatprep.subr.mxu0 0.0
    %252 = vmatpush1.msra.mxu0 0.0
    %253 = vmatprep.subr.mxu0 0.0
    %254 = vmatpush1.msra.mxu0 0.0
    %255 = vmatprep.subr.mxu0 0.0
    %256 = vmatpush1.msra.mxu0 0.0
    %257 = vmatprep.subr.mxu0 0.0
    %258 = vmatpush1.msra.mxu0 0.0
    %259 = vmatprep.subr.mxu0 0.0
    %260 = vmatpush1.msra.mxu0 0.0
    %261 = vmatprep.subr.mxu0 0.0
    %262 = vmatpush1.msra.mxu0 0.0
    %263 = vmatprep.mubr.f32.mxu0 0.0
    %264 = vmatmul.mubr.f32.gmra.mrb[0].mxu0 %v197
    %v265 = vpop.f32.mrb[0].mxu0
    %v266 = vadd.f32 0.0, %v265
    %v267 = vpop.f32.mrb[0].mxu0
    %268 = vdwg.mxu0
    %v269 = vadd.f32 %v188, %v266
    %v270 = vlaneseq
    %v271 = vshrl.u32 %v270, 7
    %v272 = vsub.s32 0, %v271
    %v273 = vrot.slane %v28, %v272
    %v274 = vadd.f32 %v269, %v273
    %v275 = vmax.f32 %v274, 0.0
    %v276 = vld [vmem:[#allocation2 + $0x98] sm:$0xf]
    %v277 = vld [vmem:[#allocation2 + $0x9c] sm:$0xf]
    %v278 = vld [vmem:[#allocation2 + $0xa0] sm:$0xf]
    %v279 = vld [vmem:[#allocation2 + $0xa4] sm:$0xf]
    %v280 = vld [vmem:[#allocation2 + $0xa8] sm:$0xf]
    %v281 = vld [vmem:[#allocation2 + $0xac] sm:$0xf]
    %v282 = vld [vmem:[#allocation2 + $0xb0] sm:$0xf]
    %v283 = vld [vmem:[#allocation2 + $0xb4] sm:$0xf]
    %v284 = vunpack.c.l.bf16 %v276
    %v285 = vunpack.c.l.bf16 %v277
    %v286 = vunpack.c.l.bf16 %v278
    %v287 = vunpack.c.l.bf16 %v279
    %v288 = vunpack.c.l.bf16 %v280
    %v289 = vunpack.c.l.bf16 %v281
    %v290 = vunpack.c.l.bf16 %v282
    %v291 = vunpack.c.l.bf16 %v283
    %v292 = vld [vmem:[#allocation2 + $0xb8] sm:$0xf]
    %v293 = vld [vmem:[#allocation2 + $0xbc] sm:$0xf]
    %v294 = vld [vmem:[#allocation2 + $0xc0] sm:$0xf]
    %v295 = vld [vmem:[#allocation2 + $0xc4] sm:$0xf]
    %v296 = vld [vmem:[#allocation2 + $0xc8] sm:$0xf]
    %v297 = vld [vmem:[#allocation2 + $0xcc] sm:$0xf]
    %v298 = vld [vmem:[#allocation2 + $0xd0] sm:$0xf]
    %v299 = vld [vmem:[#allocation2 + $0xd4] sm:$0xf]
    %v300 = vunpack.c.l.bf16 %v292
    %v301 = vunpack.c.l.bf16 %v293
    %v302 = vunpack.c.l.bf16 %v294
    %v303 = vunpack.c.l.bf16 %v295
    %v304 = vunpack.c.l.bf16 %v296
    %v305 = vunpack.c.l.bf16 %v297
    %v306 = vunpack.c.l.bf16 %v298
    %v307 = vunpack.c.l.bf16 %v299
    %v309 = vrot.slane %v275, 1
    %vm310 = vcmask 523264
    %v311 = vsel %vm310, %v309, 0
    %313 = vmatprep.subr.mxu0 0.0
    %314 = vmatpush1.msra.mxu0 %v300
    %315 = vmatprep.subr.mxu0 0.0
    %316 = vmatpush1.msra.mxu0 %v301
    %317 = vmatprep.subr.mxu0 0.0
    %318 = vmatpush1.msra.mxu0 %v302
    %319 = vmatprep.subr.mxu0 0.0
    %320 = vmatpush1.msra.mxu0 %v303
    %321 = vmatprep.subr.mxu0 0.0
    %322 = vmatpush1.msra.mxu0 %v304
    %323 = vmatprep.subr.mxu0 0.0
    %324 = vmatpush1.msra.mxu0 %v305
    %325 = vmatprep.subr.mxu0 0.0
    %326 = vmatpush1.msra.mxu0 %v306
    %327 = vmatprep.subr.mxu0 0.0
    %328 = vmatpush1.msra.mxu0 %v307
    %329 = vmatprep.subr.mxu0 0.0
    %330 = vmatpush1.msra.mxu0 0.0
    %331 = vmatprep.subr.mxu0 0.0
    %332 = vmatpush1.msra.mxu0 0.0
    %333 = vmatprep.subr.mxu0 0.0
    %334 = vmatpush1.msra.mxu0 0.0
    %335 = vmatprep.subr.mxu0 0.0
    %336 = vmatpush1.msra.mxu0 0.0
    %337 = vmatprep.subr.mxu0 0.0
    %338 = vmatpush1.msra.mxu0 0.0
    %339 = vmatprep.subr.mxu0 0.0
    %340 = vmatpush1.msra.mxu0 0.0
    %341 = vmatprep.subr.mxu0 0.0
    %342 = vmatpush1.msra.mxu0 0.0
    %343 = vmatprep.subr.mxu0 0.0
    %344 = vmatpush1.msra.mxu0 0.0
    %345 = vmatprep.subr.mxu0 0.0
    %346 = vmatpush1.msra.mxu0 0.0
    %347 = vmatprep.subr.mxu0 0.0
    %348 = vmatpush1.msra.mxu0 0.0
    %349 = vmatprep.subr.mxu0 0.0
    %350 = vmatpush1.msra.mxu0 0.0
    %351 = vmatprep.subr.mxu0 0.0
    %352 = vmatpush1.msra.mxu0 0.0
    %353 = vmatprep.subr.mxu0 0.0
    %354 = vmatpush1.msra.mxu0 0.0
    %355 = vmatprep.subr.mxu0 0.0
    %356 = vmatpush1.msra.mxu0 0.0
    %357 = vmatprep.subr.mxu0 0.0
    %358 = vmatpush1.msra.mxu0 0.0
    %359 = vmatprep.subr.mxu0 0.0
    %360 = vmatpush1.msra.mxu0 0.0
    %361 = vmatprep.subr.mxu0 0.0
    %362 = vmatpush1.msra.mxu0 0.0
    %363 = vmatprep.subr.mxu0 0.0
    %364 = vmatpush1.msra.mxu0 0.0
    %365 = vmatprep.subr.mxu0 0.0
    %366 = vmatpush1.msra.mxu0 0.0
    %367 = vmatprep.subr.mxu0 0.0
    %368 = vmatpush1.msra.mxu0 0.0
    %369 = vmatprep.subr.mxu0 0.0
    %370 = vmatpush1.msra.mxu0 0.0
    %371 = vmatprep.subr.mxu0 0.0
    %372 = vmatpush1.msra.mxu0 0.0
    %373 = vmatprep.subr.mxu0 0.0
    %374 = vmatpush1.msra.mxu0 0.0
    %375 = vmatprep.subr.mxu0 0.0
    %376 = vmatpush1.msra.mxu0 0.0
    %377 = vmatprep.mubr.f32.mxu0 0.0
    %378 = vmatmul.mubr.f32.gmra.mrb[0].mxu0 %v311
    %v379 = vpop.f32.mrb[0].mxu0
    %v380 = vadd.f32 0.0, %v379
    %v381 = vpop.f32.mrb[0].mxu0
    %382 = vdwg.mxu0
    %v383 = vsel %vm310, %v275, 0
    %385 = vmatprep.subr.mxu0 0.0
    %386 = vmatpush1.msra.mxu0 %v284
    %387 = vmatprep.subr.mxu0 0.0
    %388 = vmatpush1.msra.mxu0 %v285
    %389 = vmatprep.subr.mxu0 0.0
    %390 = vmatpush1.msra.mxu0 %v286
    %391 = vmatprep.subr.mxu0 0.0
    %392 = vmatpush1.msra.mxu0 %v287
    %393 = vmatprep.subr.mxu0 0.0
    %394 = vmatpush1.msra.mxu0 %v288
    %395 = vmatprep.subr.mxu0 0.0
    %396 = vmatpush1.msra.mxu0 %v289
    %397 = vmatprep.subr.mxu0 0.0
    %398 = vmatpush1.msra.mxu0 %v290
    %399 = vmatprep.subr.mxu0 0.0
    %400 = vmatpush1.msra.mxu0 %v291
    %401 = vmatprep.subr.mxu0 0.0
    %402 = vmatpush1.msra.mxu0 0.0
    %403 = vmatprep.subr.mxu0 0.0
    %404 = vmatpush1.msra.mxu0 0.0
    %405 = vmatprep.subr.mxu0 0.0
    %406 = vmatpush1.msra.mxu0 0.0
    %407 = vmatprep.subr.mxu0 0.0
    %408 = vmatpush1.msra.mxu0 0.0
    %409 = vmatprep.subr.mxu0 0.0
    %410 = vmatpush1.msra.mxu0 0.0
    %411 = vmatprep.subr.mxu0 0.0
    %412 = vmatpush1.msra.mxu0 0.0
    %413 = vmatprep.subr.mxu0 0.0
    %414 = vmatpush1.msra.mxu0 0.0
    %415 = vmatprep.subr.mxu0 0.0
    %416 = vmatpush1.msra.mxu0 0.0
    %417 = vmatprep.subr.mxu0 0.0
    %418 = vmatpush1.msra.mxu0 0.0
    %419 = vmatprep.subr.mxu0 0.0
    %420 = vmatpush1.msra.mxu0 0.0
    %421 = vmatprep.subr.mxu0 0.0
    %422 = vmatpush1.msra.mxu0 0.0
    %423 = vmatprep.subr.mxu0 0.0
    %424 = vmatpush1.msra.mxu0 0.0
    %425 = vmatprep.subr.mxu0 0.0
    %426 = vmatpush1.msra.mxu0 0.0
    %427 = vmatprep.subr.mxu0 0.0
    %428 = vmatpush1.msra.mxu0 0.0
    %429 = vmatprep.subr.mxu0 0.0
    %430 = vmatpush1.msra.mxu0 0.0
    %431 = vmatprep.subr.mxu0 0.0
    %432 = vmatpush1.msra.mxu0 0.0
    %433 = vmatprep.subr.mxu0 0.0
    %434 = vmatpush1.msra.mxu0 0.0
    %435 = vmatprep.subr.mxu0 0.0
    %436 = vmatpush1.msra.mxu0 0.0
    %437 = vmatprep.subr.mxu0 0.0
    %438 = vmatpush1.msra.mxu0 0.0
    %439 = vmatprep.subr.mxu0 0.0
    %440 = vmatpush1.msra.mxu0 0.0
    %441 = vmatprep.subr.mxu0 0.0
    %442 = vmatpush1.msra.mxu0 0.0
    %443 = vmatprep.subr.mxu0 0.0
    %444 = vmatpush1.msra.mxu0 0.0
    %445 = vmatprep.subr.mxu0 0.0
    %446 = vmatpush1.msra.mxu0 0.0
    %447 = vmatprep.subr.mxu0 0.0
    %448 = vmatpush1.msra.mxu0 0.0
    %449 = vmatprep.mubr.f32.mxu0 0.0
    %450 = vmatmul.mubr.f32.gmra.mrb[0].mxu0 %v383
    %v451 = vpop.f32.mrb[0].mxu0
    %v452 = vadd.f32 %v380, %v451
    %v453 = vpop.f32.mrb[0].mxu0
    %454 = vdwg.mxu0
    %v455 = vld [vmem:[#allocation2 + $0xd8] sm:$0xf]
    %v456 = vld [vmem:[#allocation2 + $0xdc] sm:$0xf]
    %v457 = vld [vmem:[#allocation2 + $0xe0] sm:$0xf]
    %v458 = vld [vmem:[#allocation2 + $0xe4] sm:$0xf]
    %v459 = vld [vmem:[#allocation2 + $0xe8] sm:$0xf]
    %v460 = vld [vmem:[#allocation2 + $0xec] sm:$0xf]
    %v461 = vld [vmem:[#allocation2 + $0xf0] sm:$0xf]
    %v462 = vld [vmem:[#allocation2 + $0xf4] sm:$0xf]
    %v463 = vunpack.c.l.bf16 %v455
    %v464 = vunpack.c.l.bf16 %v456
    %v465 = vunpack.c.l.bf16 %v457
    %v466 = vunpack.c.l.bf16 %v458
    %v467 = vunpack.c.l.bf16 %v459
    %v468 = vunpack.c.l.bf16 %v460
    %v469 = vunpack.c.l.bf16 %v461
    %v470 = vunpack.c.l.bf16 %v462
    %v471 = vrot.slane %v275, 2
    %v472 = vsel %vm310, %v471, 0
    %474 = vmatprep.subr.mxu0 0.0
    %475 = vmatpush1.msra.mxu0 %v463
    %476 = vmatprep.subr.mxu0 0.0
    %477 = vmatpush1.msra.mxu0 %v464
    %478 = vmatprep.subr.mxu0 0.0
    %479 = vmatpush1.msra.mxu0 %v465
    %480 = vmatprep.subr.mxu0 0.0
    %481 = vmatpush1.msra.mxu0 %v466
    %482 = vmatprep.subr.mxu0 0.0
    %483 = vmatpush1.msra.mxu0 %v467
    %484 = vmatprep.subr.mxu0 0.0
    %485 = vmatpush1.msra.mxu0 %v468
    %486 = vmatprep.subr.mxu0 0.0
    %487 = vmatpush1.msra.mxu0 %v469
    %488 = vmatprep.subr.mxu0 0.0
    %489 = vmatpush1.msra.mxu0 %v470
    %490 = vmatprep.subr.mxu0 0.0
    %491 = vmatpush1.msra.mxu0 0.0
    %492 = vmatprep.subr.mxu0 0.0
    %493 = vmatpush1.msra.mxu0 0.0
    %494 = vmatprep.subr.mxu0 0.0
    %495 = vmatpush1.msra.mxu0 0.0
    %496 = vmatprep.subr.mxu0 0.0
    %497 = vmatpush1.msra.mxu0 0.0
    %498 = vmatprep.subr.mxu0 0.0
    %499 = vmatpush1.msra.mxu0 0.0
    %500 = vmatprep.subr.mxu0 0.0
    %501 = vmatpush1.msra.mxu0 0.0
    %502 = vmatprep.subr.mxu0 0.0
    %503 = vmatpush1.msra.mxu0 0.0
    %504 = vmatprep.subr.mxu0 0.0
    %505 = vmatpush1.msra.mxu0 0.0
    %506 = vmatprep.subr.mxu0 0.0
    %507 = vmatpush1.msra.mxu0 0.0
    %508 = vmatprep.subr.mxu0 0.0
    %509 = vmatpush1.msra.mxu0 0.0
    %510 = vmatprep.subr.mxu0 0.0
    %511 = vmatpush1.msra.mxu0 0.0
    %512 = vmatprep.subr.mxu0 0.0
    %513 = vmatpush1.msra.mxu0 0.0
    %514 = vmatprep.subr.mxu0 0.0
    %515 = vmatpush1.msra.mxu0 0.0
    %516 = vmatprep.subr.mxu0 0.0
    %517 = vmatpush1.msra.mxu0 0.0
    %518 = vmatprep.subr.mxu0 0.0
    %519 = vmatpush1.msra.mxu0 0.0
    %520 = vmatprep.subr.mxu0 0.0
    %521 = vmatpush1.msra.mxu0 0.0
    %522 = vmatprep.subr.mxu0 0.0
    %523 = vmatpush1.msra.mxu0 0.0
    %524 = vmatprep.subr.mxu0 0.0
    %525 = vmatpush1.msra.mxu0 0.0
    %526 = vmatprep.subr.mxu0 0.0
    %527 = vmatpush1.msra.mxu0 0.0
    %528 = vmatprep.subr.mxu0 0.0
    %529 = vmatpush1.msra.mxu0 0.0
    %530 = vmatprep.subr.mxu0 0.0
    %531 = vmatpush1.msra.mxu0 0.0
    %532 = vmatprep.subr.mxu0 0.0
    %533 = vmatpush1.msra.mxu0 0.0
    %534 = vmatprep.subr.mxu0 0.0
    %535 = vmatpush1.msra.mxu0 0.0
    %536 = vmatprep.subr.mxu0 0.0
    %537 = vmatpush1.msra.mxu0 0.0
    %538 = vmatprep.mubr.f32.mxu0 0.0
    %539 = vmatmul.mubr.f32.gmra.mrb[0].mxu0 %v472
    %v540 = vpop.f32.mrb[0].mxu0
    %v541 = vadd.f32 0.0, %v540
    %v542 = vpop.f32.mrb[0].mxu0
    %543 = vdwg.mxu0
    %v544 = vadd.f32 %v452, %v541
    %v545 = vlaneseq
    %v546 = vshrl.u32 %v545, 7
    %v547 = vsub.s32 0, %v546
    %v548 = vrot.slane %v29, %v547
    %v549 = vadd.f32 %v544, %v548
    %v550 = vmax.f32 %v549, 0.0
    %v551 = vld [vmem:[#allocation2] sm:$0xf]
    %v552 = vld [vmem:[#allocation2 + $0x4] sm:$0xf]
    %v553 = vld [vmem:[#allocation2 + $0x8] sm:$0xf]
    %v554 = vld [vmem:[#allocation2 + $0xc] sm:$0xf]
    %v555 = vld [vmem:[#allocation2 + $0x10] sm:$0xf]
    %v556 = vld [vmem:[#allocation2 + $0x14] sm:$0xf]
    %v557 = vld [vmem:[#allocation2 + $0x18] sm:$0xf]
    %v558 = vld [vmem:[#allocation2 + $0x1c] sm:$0xf]
    %v559 = vunpack.c.l.bf16 %v551
    %v560 = vunpack.c.l.bf16 %v552
    %v561 = vunpack.c.l.bf16 %v553
    %v562 = vunpack.c.l.bf16 %v554
    %v563 = vunpack.c.l.bf16 %v555
    %v564 = vunpack.c.l.bf16 %v556
    %v565 = vunpack.c.l.bf16 %v557
    %v566 = vunpack.c.l.bf16 %v558
    %v567 = vld [vmem:[#allocation2 + $0x20] sm:$0xf]
    %v568 = vld [vmem:[#allocation2 + $0x24] sm:$0xf]
    %v569 = vld [vmem:[#allocation2 + $0x28] sm:$0xf]
    %v570 = vld [vmem:[#allocation2 + $0x2c] sm:$0xf]
    %v571 = vld [vmem:[#allocation2 + $0x30] sm:$0xf]
    %v572 = vld [vmem:[#allocation2 + $0x34] sm:$0xf]
    %v573 = vld [vmem:[#allocation2 + $0x38] sm:$0xf]
    %v574 = vld [vmem:[#allocation2 + $0x3c] sm:$0xf]
    %v575 = vunpack.c.l.bf16 %v567
    %v576 = vunpack.c.l.bf16 %v568
    %v577 = vunpack.c.l.bf16 %v569
    %v578 = vunpack.c.l.bf16 %v570
    %v579 = vunpack.c.l.bf16 %v571
    %v580 = vunpack.c.l.bf16 %v572
    %v581 = vunpack.c.l.bf16 %v573
    %v582 = vunpack.c.l.bf16 %v574
    %v584 = vrot.slane %v550, 1
    %v585 = vsel %vm310, %v584, 0
    %587 = vmatprep.subr.mxu0 0.0
    %588 = vmatpush1.msra.mxu0 %v575
    %589 = vmatprep.subr.mxu0 0.0
    %590 = vmatpush1.msra.mxu0 %v576
    %591 = vmatprep.subr.mxu0 0.0
    %592 = vmatpush1.msra.mxu0 %v577
    %593 = vmatprep.subr.mxu0 0.0
    %594 = vmatpush1.msra.mxu0 %v578
    %595 = vmatprep.subr.mxu0 0.0
    %596 = vmatpush1.msra.mxu0 %v579
    %597 = vmatprep.subr.mxu0 0.0
    %598 = vmatpush1.msra.mxu0 %v580
    %599 = vmatprep.subr.mxu0 0.0
    %600 = vmatpush1.msra.mxu0 %v581
    %601 = vmatprep.subr.mxu0 0.0
    %602 = vmatpush1.msra.mxu0 %v582
    %603 = vmatprep.subr.mxu0 0.0
    %604 = vmatpush1.msra.mxu0 0.0
    %605 = vmatprep.subr.mxu0 0.0
    %606 = vmatpush1.msra.mxu0 0.0
    %607 = vmatprep.subr.mxu0 0.0
    %608 = vmatpush1.msra.mxu0 0.0
    %609 = vmatprep.subr.mxu0 0.0
    %610 = vmatpush1.msra.mxu0 0.0
    %611 = vmatprep.subr.mxu0 0.0
    %612 = vmatpush1.msra.mxu0 0.0
    %613 = vmatprep.subr.mxu0 0.0
    %614 = vmatpush1.msra.mxu0 0.0
    %615 = vmatprep.subr.mxu0 0.0
    %616 = vmatpush1.msra.mxu0 0.0
    %617 = vmatprep.subr.mxu0 0.0
    %618 = vmatpush1.msra.mxu0 0.0
    %619 = vmatprep.subr.mxu0 0.0
    %620 = vmatpush1.msra.mxu0 0.0
    %621 = vmatprep.subr.mxu0 0.0
    %622 = vmatpush1.msra.mxu0 0.0
    %623 = vmatprep.subr.mxu0 0.0
    %624 = vmatpush1.msra.mxu0 0.0
    %625 = vmatprep.subr.mxu0 0.0
    %626 = vmatpush1.msra.mxu0 0.0
    %627 = vmatprep.subr.mxu0 0.0
    %628 = vmatpush1.msra.mxu0 0.0
    %629 = vmatprep.subr.mxu0 0.0
    %630 = vmatpush1.msra.mxu0 0.0
    %631 = vmatprep.subr.mxu0 0.0
    %632 = vmatpush1.msra.mxu0 0.0
    %633 = vmatprep.subr.mxu0 0.0
    %634 = vmatpush1.msra.mxu0 0.0
    %635 = vmatprep.subr.mxu0 0.0
    %636 = vmatpush1.msra.mxu0 0.0
    %637 = vmatprep.subr.mxu0 0.0
    %638 = vmatpush1.msra.mxu0 0.0
    %639 = vmatprep.subr.mxu0 0.0
    %640 = vmatpush1.msra.mxu0 0.0
    %641 = vmatprep.subr.mxu0 0.0
    %642 = vmatpush1.msra.mxu0 0.0
    %643 = vmatprep.subr.mxu0 0.0
    %644 = vmatpush1.msra.mxu0 0.0
    %645 = vmatprep.subr.mxu0 0.0
    %646 = vmatpush1.msra.mxu0 0.0
    %647 = vmatprep.subr.mxu0 0.0
    %648 = vmatpush1.msra.mxu0 0.0
    %649 = vmatprep.subr.mxu0 0.0
    %650 = vmatpush1.msra.mxu0 0.0
    %651 = vmatprep.mubr.f32.mxu0 0.0
    %652 = vmatmul.mubr.f32.gmra.mrb[0].mxu0 %v585
    %v653 = vpop.f32.mrb[0].mxu0
    %v654 = vadd.f32 0.0, %v653
    %v655 = vpop.f32.mrb[0].mxu0
    %656 = vdwg.mxu0
    %v657 = vsel %vm310, %v550, 0
    %659 = vmatprep.subr.mxu0 0.0
    %660 = vmatpush1.msra.mxu0 %v559
    %661 = vmatprep.subr.mxu0 0.0
    %662 = vmatpush1.msra.mxu0 %v560
    %663 = vmatprep.subr.mxu0 0.0
    %664 = vmatpush1.msra.mxu0 %v561
    %665 = vmatprep.subr.mxu0 0.0
    %666 = vmatpush1.msra.mxu0 %v562
    %667 = vmatprep.subr.mxu0 0.0
    %668 = vmatpush1.msra.mxu0 %v563
    %669 = vmatprep.subr.mxu0 0.0
    %670 = vmatpush1.msra.mxu0 %v564
    %671 = vmatprep.subr.mxu0 0.0
    %672 = vmatpush1.msra.mxu0 %v565
    %673 = vmatprep.subr.mxu0 0.0
    %674 = vmatpush1.msra.mxu0 %v566
    %675 = vmatprep.subr.mxu0 0.0
    %676 = vmatpush1.msra.mxu0 0.0
    %677 = vmatprep.subr.mxu0 0.0
    %678 = vmatpush1.msra.mxu0 0.0
    %679 = vmatprep.subr.mxu0 0.0
    %680 = vmatpush1.msra.mxu0 0.0
    %681 = vmatprep.subr.mxu0 0.0
    %682 = vmatpush1.msra.mxu0 0.0
    %683 = vmatprep.subr.mxu0 0.0
    %684 = vmatpush1.msra.mxu0 0.0
    %685 = vmatprep.subr.mxu0 0.0
    %686 = vmatpush1.msra.mxu0 0.0
    %687 = vmatprep.subr.mxu0 0.0
    %688 = vmatpush1.msra.mxu0 0.0
    %689 = vmatprep.subr.mxu0 0.0
    %690 = vmatpush1.msra.mxu0 0.0
    %691 = vmatprep.subr.mxu0 0.0
    %692 = vmatpush1.msra.mxu0 0.0
    %693 = vmatprep.subr.mxu0 0.0
    %694 = vmatpush1.msra.mxu0 0.0
    %695 = vmatprep.subr.mxu0 0.0
    %696 = vmatpush1.msra.mxu0 0.0
    %697 = vmatprep.subr.mxu0 0.0
    %698 = vmatpush1.msra.mxu0 0.0
    %699 = vmatprep.subr.mxu0 0.0
    %700 = vmatpush1.msra.mxu0 0.0
    %701 = vmatprep.subr.mxu0 0.0
    %702 = vmatpush1.msra.mxu0 0.0
    %703 = vmatprep.subr.mxu0 0.0
    %704 = vmatpush1.msra.mxu0 0.0
    %705 = vmatprep.subr.mxu0 0.0
    %706 = vmatpush1.msra.mxu0 0.0
    %707 = vmatprep.subr.mxu0 0.0
    %708 = vmatpush1.msra.mxu0 0.0
    %709 = vmatprep.subr.mxu0 0.0
    %710 = vmatpush1.msra.mxu0 0.0
    %711 = vmatprep.subr.mxu0 0.0
    %712 = vmatpush1.msra.mxu0 0.0
    %713 = vmatprep.subr.mxu0 0.0
    %714 = vmatpush1.msra.mxu0 0.0
    %715 = vmatprep.subr.mxu0 0.0
    %716 = vmatpush1.msra.mxu0 0.0
    %717 = vmatprep.subr.mxu0 0.0
    %718 = vmatpush1.msra.mxu0 0.0
    %719 = vmatprep.subr.mxu0 0.0
    %720 = vmatpush1.msra.mxu0 0.0
    %721 = vmatprep.subr.mxu0 0.0
    %722 = vmatpush1.msra.mxu0 0.0
    %723 = vmatprep.mubr.f32.mxu0 0.0
    %724 = vmatmul.mubr.f32.gmra.mrb[0].mxu0 %v657
    %v725 = vpop.f32.mrb[0].mxu0
    %v726 = vadd.f32 %v654, %v725
    %v727 = vpop.f32.mrb[0].mxu0
    %728 = vdwg.mxu0
    %v729 = vld [vmem:[#allocation2 + $0x40] sm:$0xf]
    %v730 = vld [vmem:[#allocation2 + $0x44] sm:$0xf]
    %v731 = vld [vmem:[#allocation2 + $0x48] sm:$0xf]
    %v732 = vld [vmem:[#allocation2 + $0x4c] sm:$0xf]
    %v733 = vld [vmem:[#allocation2 + $0x50] sm:$0xf]
    %v734 = vld [vmem:[#allocation2 + $0x54] sm:$0xf]
    %v735 = vld [vmem:[#allocation2 + $0x58] sm:$0xf]
    %v736 = vld [vmem:[#allocation2 + $0x5c] sm:$0xf]
    %v737 = vunpack.c.l.bf16 %v729
    %v738 = vunpack.c.l.bf16 %v730
    %v739 = vunpack.c.l.bf16 %v731
    %v740 = vunpack.c.l.bf16 %v732
    %v741 = vunpack.c.l.bf16 %v733
    %v742 = vunpack.c.l.bf16 %v734
    %v743 = vunpack.c.l.bf16 %v735
    %v744 = vunpack.c.l.bf16 %v736
    %v745 = vrot.slane %v550, 2
    %v746 = vsel %vm310, %v745, 0
    %748 = vmatprep.subr.mxu0 0.0
    %749 = vmatpush1.msra.mxu0 %v737
    %750 = vmatprep.subr.mxu0 0.0
    %751 = vmatpush1.msra.mxu0 %v738
    %752 = vmatprep.subr.mxu0 0.0
    %753 = vmatpush1.msra.mxu0 %v739
    %754 = vmatprep.subr.mxu0 0.0
    %755 = vmatpush1.msra.mxu0 %v740
    %756 = vmatprep.subr.mxu0 0.0
    %757 = vmatpush1.msra.mxu0 %v741
    %758 = vmatprep.subr.mxu0 0.0
    %759 = vmatpush1.msra.mxu0 %v742
    %760 = vmatprep.subr.mxu0 0.0
    %761 = vmatpush1.msra.mxu0 %v743
    %762 = vmatprep.subr.mxu0 0.0
    %763 = vmatpush1.msra.mxu0 %v744
    %764 = vmatprep.subr.mxu0 0.0
    %765 = vmatpush1.msra.mxu0 0.0
    %766 = vmatprep.subr.mxu0 0.0
    %767 = vmatpush1.msra.mxu0 0.0
    %768 = vmatprep.subr.mxu0 0.0
    %769 = vmatpush1.msra.mxu0 0.0
    %770 = vmatprep.subr.mxu0 0.0
    %771 = vmatpush1.msra.mxu0 0.0
    %772 = vmatprep.subr.mxu0 0.0
    %773 = vmatpush1.msra.mxu0 0.0
    %774 = vmatprep.subr.mxu0 0.0
    %775 = vmatpush1.msra.mxu0 0.0
    %776 = vmatprep.subr.mxu0 0.0
    %777 = vmatpush1.msra.mxu0 0.0
    %778 = vmatprep.subr.mxu0 0.0
    %779 = vmatpush1.msra.mxu0 0.0
    %780 = vmatprep.subr.mxu0 0.0
    %781 = vmatpush1.msra.mxu0 0.0
    %782 = vmatprep.subr.mxu0 0.0
    %783 = vmatpush1.msra.mxu0 0.0
    %784 = vmatprep.subr.mxu0 0.0
    %785 = vmatpush1.msra.mxu0 0.0
    %786 = vmatprep.subr.mxu0 0.0
    %787 = vmatpush1.msra.mxu0 0.0
    %788 = vmatprep.subr.mxu0 0.0
    %789 = vmatpush1.msra.mxu0 0.0
    %790 = vmatprep.subr.mxu0 0.0
    %791 = vmatpush1.msra.mxu0 0.0
    %792 = vmatprep.subr.mxu0 0.0
    %793 = vmatpush1.msra.mxu0 0.0
    %794 = vmatprep.subr.mxu0 0.0
    %795 = vmatpush1.msra.mxu0 0.0
    %796 = vmatprep.subr.mxu0 0.0
    %797 = vmatpush1.msra.mxu0 0.0
    %798 = vmatprep.subr.mxu0 0.0
    %799 = vmatpush1.msra.mxu0 0.0
    %800 = vmatprep.subr.mxu0 0.0
    %801 = vmatpush1.msra.mxu0 0.0
    %802 = vmatprep.subr.mxu0 0.0
    %803 = vmatpush1.msra.mxu0 0.0
    %804 = vmatprep.subr.mxu0 0.0
    %805 = vmatpush1.msra.mxu0 0.0
    %806 = vmatprep.subr.mxu0 0.0
    %807 = vmatpush1.msra.mxu0 0.0
    %808 = vmatprep.subr.mxu0 0.0
    %809 = vmatpush1.msra.mxu0 0.0
    %810 = vmatprep.subr.mxu0 0.0
    %811 = vmatpush1.msra.mxu0 0.0
    %812 = vmatprep.mubr.f32.mxu0 0.0
    %813 = vmatmul.mubr.f32.gmra.mrb[0].mxu0 %v746
    %v814 = vpop.f32.mrb[0].mxu0
    %v815 = vadd.f32 0.0, %v814
    %v816 = vpop.f32.mrb[0].mxu0
    %817 = vdwg.mxu0
    %v818 = vadd.f32 %v726, %v815
    %v819 = vld [vmem:[#allocation2 + $0x60] sm:$0xf]
    %v820 = vld [vmem:[#allocation2 + $0x64] sm:$0xf]
    %v821 = vld [vmem:[#allocation2 + $0x68] sm:$0xf]
    %v822 = vld [vmem:[#allocation2 + $0x6c] sm:$0xf]
    %v823 = vld [vmem:[#allocation2 + $0x70] sm:$0xf]
    %v824 = vld [vmem:[#allocation2 + $0x74] sm:$0xf]
    %v825 = vld [vmem:[#allocation2 + $0x78] sm:$0xf]
    %v826 = vld [vmem:[#allocation2 + $0x7c] sm:$0xf]
    %v827 = vunpack.c.l.bf16 %v819
    %v828 = vunpack.c.l.bf16 %v820
    %v829 = vunpack.c.l.bf16 %v821
    %v830 = vunpack.c.l.bf16 %v822
    %v831 = vunpack.c.l.bf16 %v823
    %v832 = vunpack.c.l.bf16 %v824
    %v833 = vunpack.c.l.bf16 %v825
    %v834 = vunpack.c.l.bf16 %v826
    %v835 = vrot.slane %v550, 3
    %v836 = vsel %vm310, %v835, 0
    %838 = vmatprep.subr.mxu0 0.0
    %839 = vmatpush1.msra.mxu0 %v827
    %840 = vmatprep.subr.mxu0 0.0
    %841 = vmatpush1.msra.mxu0 %v828
    %842 = vmatprep.subr.mxu0 0.0
    %843 = vmatpush1.msra.mxu0 %v829
    %844 = vmatprep.subr.mxu0 0.0
    %845 = vmatpush1.msra.mxu0 %v830
    %846 = vmatprep.subr.mxu0 0.0
    %847 = vmatpush1.msra.mxu0 %v831
    %848 = vmatprep.subr.mxu0 0.0
    %849 = vmatpush1.msra.mxu0 %v832
    %850 = vmatprep.subr.mxu0 0.0
    %851 = vmatpush1.msra.mxu0 %v833
    %852 = vmatprep.subr.mxu0 0.0
    %853 = vmatpush1.msra.mxu0 %v834
    %854 = vmatprep.subr.mxu0 0.0
    %855 = vmatpush1.msra.mxu0 0.0
    %856 = vmatprep.subr.mxu0 0.0
    %857 = vmatpush1.msra.mxu0 0.0
    %858 = vmatprep.subr.mxu0 0.0
    %859 = vmatpush1.msra.mxu0 0.0
    %860 = vmatprep.subr.mxu0 0.0
    %861 = vmatpush1.msra.mxu0 0.0
    %862 = vmatprep.subr.mxu0 0.0
    %863 = vmatpush1.msra.mxu0 0.0
    %864 = vmatprep.subr.mxu0 0.0
    %865 = vmatpush1.msra.mxu0 0.0
    %866 = vmatprep.subr.mxu0 0.0
    %867 = vmatpush1.msra.mxu0 0.0
    %868 = vmatprep.subr.mxu0 0.0
    %869 = vmatpush1.msra.mxu0 0.0
    %870 = vmatprep.subr.mxu0 0.0
    %871 = vmatpush1.msra.mxu0 0.0
    %872 = vmatprep.subr.mxu0 0.0
    %873 = vmatpush1.msra.mxu0 0.0
    %874 = vmatprep.subr.mxu0 0.0
    %875 = vmatpush1.msra.mxu0 0.0
    %876 = vmatprep.subr.mxu0 0.0
    %877 = vmatpush1.msra.mxu0 0.0
    %878 = vmatprep.subr.mxu0 0.0
    %879 = vmatpush1.msra.mxu0 0.0
    %880 = vmatprep.subr.mxu0 0.0
    %881 = vmatpush1.msra.mxu0 0.0
    %882 = vmatprep.subr.mxu0 0.0
    %883 = vmatpush1.msra.mxu0 0.0
    %884 = vmatprep.subr.mxu0 0.0
    %885 = vmatpush1.msra.mxu0 0.0
    %886 = vmatprep.subr.mxu0 0.0
    %887 = vmatpush1.msra.mxu0 0.0
    %888 = vmatprep.subr.mxu0 0.0
    %889 = vmatpush1.msra.mxu0 0.0
    %890 = vmatprep.subr.mxu0 0.0
    %891 = vmatpush1.msra.mxu0 0.0
    %892 = vmatprep.subr.mxu0 0.0
    %893 = vmatpush1.msra.mxu0 0.0
    %894 = vmatprep.subr.mxu0 0.0
    %895 = vmatpush1.msra.mxu0 0.0
    %896 = vmatprep.subr.mxu0 0.0
    %897 = vmatpush1.msra.mxu0 0.0
    %898 = vmatprep.subr.mxu0 0.0
    %899 = vmatpush1.msra.mxu0 0.0
    %900 = vmatprep.subr.mxu0 0.0
    %901 = vmatpush1.msra.mxu0 0.0
    %902 = vmatprep.mubr.f32.mxu0 0.0
    %903 = vmatmul.mubr.f32.gmra.mrb[0].mxu0 %v836
    %v904 = vpop.f32.mrb[0].mxu0
    %v905 = vadd.f32 0.0, %v904
    %v906 = vpop.f32.mrb[0].mxu0
    %907 = vdwg.mxu0
    %v908 = vadd.f32 %v818, %v905
    %v909 = vadd.f32 %v908, %v30
    %v910 = vmax.f32 %v909, 0.0
    %v911 = vld [vmem:[%s0 + $0x8] sm:$0x3f]
    %v912 = vld [vmem:[%s0 + $0x9] sm:$0x3f]
    %v914 = vsel %vm44, %v912, 0
    %916 = vmatprep.subr.mxu0 0.0
    %917 = vmatpush1.msra.mxu0 %v42
    %918 = vmatprep.subr.mxu0 0.0
    %919 = vmatpush1.msra.mxu0 %v43
    %920 = vmatprep.subr.mxu0 0.0
    %921 = vmatpush1.msra.mxu0 0.0
    %922 = vmatprep.subr.mxu0 0.0
    %923 = vmatpush1.msra.mxu0 0.0
    %924 = vmatprep.subr.mxu0 0.0
    %925 = vmatpush1.msra.mxu0 0.0
    %926 = vmatprep.subr.mxu0 0.0
    %927 = vmatpush1.msra.mxu0 0.0
    %928 = vmatprep.subr.mxu0 0.0
    %929 = vmatpush1.msra.mxu0 0.0
    %930 = vmatprep.subr.mxu0 0.0
    %931 = vmatpush1.msra.mxu0 0.0
    %932 = vmatprep.subr.mxu0 0.0
    %933 = vmatpush1.msra.mxu0 0.0
    %934 = vmatprep.subr.mxu0 0.0
    %935 = vmatpush1.msra.mxu0 0.0
    %936 = vmatprep.subr.mxu0 0.0
    %937 = vmatpush1.msra.mxu0 0.0
    %938 = vmatprep.subr.mxu0 0.0
    %939 = vmatpush1.msra.mxu0 0.0
    %940 = vmatprep.subr.mxu0 0.0
    %941 = vmatpush1.msra.mxu0 0.0
    %942 = vmatprep.subr.mxu0 0.0
    %943 = vmatpush1.msra.mxu0 0.0
    %944 = vmatprep.subr.mxu0 0.0
    %945 = vmatpush1.msra.mxu0 0.0
    %946 = vmatprep.subr.mxu0 0.0
    %947 = vmatpush1.msra.mxu0 0.0
    %948 = vmatprep.subr.mxu0 0.0
    %949 = vmatpush1.msra.mxu0 0.0
    %950 = vmatprep.subr.mxu0 0.0
    %951 = vmatpush1.msra.mxu0 0.0
    %952 = vmatprep.subr.mxu0 0.0
    %953 = vmatpush1.msra.mxu0 0.0
    %954 = vmatprep.subr.mxu0 0.0
    %955 = vmatpush1.msra.mxu0 0.0
    %956 = vmatprep.subr.mxu0 0.0
    %957 = vmatpush1.msra.mxu0 0.0
    %958 = vmatprep.subr.mxu0 0.0
    %959 = vmatpush1.msra.mxu0 0.0
    %960 = vmatprep.subr.mxu0 0.0
    %961 = vmatpush1.msra.mxu0 0.0
    %962 = vmatprep.subr.mxu0 0.0
    %963 = vmatpush1.msra.mxu0 0.0
    %964 = vmatprep.subr.mxu0 0.0
    %965 = vmatpush1.msra.mxu0 0.0
    %966 = vmatprep.subr.mxu0 0.0
    %967 = vmatpush1.msra.mxu0 0.0
    %968 = vmatprep.subr.mxu0 0.0
    %969 = vmatpush1.msra.mxu0 0.0
    %970 = vmatprep.subr.mxu0 0.0
    %971 = vmatpush1.msra.mxu0 0.0
    %972 = vmatprep.subr.mxu0 0.0
    %973 = vmatpush1.msra.mxu0 0.0
    %974 = vmatprep.subr.mxu0 0.0
    %975 = vmatpush1.msra.mxu0 0.0
    %976 = vmatprep.subr.mxu0 0.0
    %977 = vmatpush1.msra.mxu0 0.0
    %978 = vmatprep.subr.mxu0 0.0
    %979 = vmatpush1.msra.mxu0 0.0
    %980 = vmatprep.mubr.f32.mxu0 0.0
    %981 = vmatmul.mubr.f32.gmra.mrb[0].mxu0 %v914
    %v982 = vpop.f32.mrb[0].mxu0
    %v983 = vadd.f32 0.0, %v982
    %v984 = vpop.f32.mrb[0].mxu0
    %985 = vdwg.mxu0
    %v987 = vsel %vm44, %v911, 0
    %989 = vmatprep.subr.mxu0 0.0
    %990 = vmatpush1.msra.mxu0 %v37
    %991 = vmatprep.subr.mxu0 0.0
    %992 = vmatpush1.msra.mxu0 %v38
    %993 = vmatprep.subr.mxu0 0.0
    %994 = vmatpush1.msra.mxu0 0.0
    %995 = vmatprep.subr.mxu0 0.0
    %996 = vmatpush1.msra.mxu0 0.0
    %997 = vmatprep.subr.mxu0 0.0
    %998 = vmatpush1.msra.mxu0 0.0
    %999 = vmatprep.subr.mxu0 0.0
    %1000 = vmatpush1.msra.mxu0 0.0
    %1001 = vmatprep.subr.mxu0 0.0
    %1002 = vmatpush1.msra.mxu0 0.0
    %1003 = vmatprep.subr.mxu0 0.0
    %1004 = vmatpush1.msra.mxu0 0.0
    %1005 = vmatprep.subr.mxu0 0.0
    %1006 = vmatpush1.msra.mxu0 0.0
    %1007 = vmatprep.subr.mxu0 0.0
    %1008 = vmatpush1.msra.mxu0 0.0
    %1009 = vmatprep.subr.mxu0 0.0
    %1010 = vmatpush1.msra.mxu0 0.0
    %1011 = vmatprep.subr.mxu0 0.0
    %1012 = vmatpush1.msra.mxu0 0.0
    %1013 = vmatprep.subr.mxu0 0.0
    %1014 = vmatpush1.msra.mxu0 0.0
    %1015 = vmatprep.subr.mxu0 0.0
    %1016 = vmatpush1.msra.mxu0 0.0
    %1017 = vmatprep.subr.mxu0 0.0
    %1018 = vmatpush1.msra.mxu0 0.0
    %1019 = vmatprep.subr.mxu0 0.0
    %1020 = vmatpush1.msra.mxu0 0.0
    %1021 = vmatprep.subr.mxu0 0.0
    %1022 = vmatpush1.msra.mxu0 0.0
    %1023 = vmatprep.subr.mxu0 0.0
    %1024 = vmatpush1.msra.mxu0 0.0
    %1025 = vmatprep.subr.mxu0 0.0
    %1026 = vmatpush1.msra.mxu0 0.0
    %1027 = vmatprep.subr.mxu0 0.0
    %1028 = vmatpush1.msra.mxu0 0.0
    %1029 = vmatprep.subr.mxu0 0.0
    %1030 = vmatpush1.msra.mxu0 0.0
    %1031 = vmatprep.subr.mxu0 0.0
    %1032 = vmatpush1.msra.mxu0 0.0
    %1033 = vmatprep.subr.mxu0 0.0
    %1034 = vmatpush1.msra.mxu0 0.0
    %1035 = vmatprep.subr.mxu0 0.0
    %1036 = vmatpush1.msra.mxu0 0.0
    %1037 = vmatprep.subr.mxu0 0.0
    %1038 = vmatpush1.msra.mxu0 0.0
    %1039 = vmatprep.subr.mxu0 0.0
    %1040 = vmatpush1.msra.mxu0 0.0
    %1041 = vmatprep.subr.mxu0 0.0
    %1042 = vmatpush1.msra.mxu0 0.0
    %1043 = vmatprep.subr.mxu0 0.0
    %1044 = vmatpush1.msra.mxu0 0.0
    %1045 = vmatprep.subr.mxu0 0.0
    %1046 = vmatpush1.msra.mxu0 0.0
    %1047 = vmatprep.subr.mxu0 0.0
    %1048 = vmatpush1.msra.mxu0 0.0
    %1049 = vmatprep.subr.mxu0 0.0
    %1050 = vmatpush1.msra.mxu0 0.0
    %1051 = vmatprep.subr.mxu0 0.0
    %1052 = vmatpush1.msra.mxu0 0.0
    %1053 = vmatprep.mubr.f32.mxu0 0.0
    %1054 = vmatmul.mubr.f32.gmra.mrb[0].mxu0 %v987
    %v1055 = vpop.f32.mrb[0].mxu0
    %v1056 = vadd.f32 %v983, %v1055
    %v1057 = vpop.f32.mrb[0].mxu0
    %1058 = vdwg.mxu0
    %v1059 = vld [vmem:[%s0 + $0xa] sm:$0x3f]
    %v1061 = vsel %vm44, %v1059, 0
    %1063 = vmatprep.subr.mxu0 0.0
    %1064 = vmatpush1.msra.mxu0 %v194
    %1065 = vmatprep.subr.mxu0 0.0
    %1066 = vmatpush1.msra.mxu0 %v195
    %1067 = vmatprep.subr.mxu0 0.0
    %1068 = vmatpush1.msra.mxu0 0.0
    %1069 = vmatprep.subr.mxu0 0.0
    %1070 = vmatpush1.msra.mxu0 0.0
    %1071 = vmatprep.subr.mxu0 0.0
    %1072 = vmatpush1.msra.mxu0 0.0
    %1073 = vmatprep.subr.mxu0 0.0
    %1074 = vmatpush1.msra.mxu0 0.0
    %1075 = vmatprep.subr.mxu0 0.0
    %1076 = vmatpush1.msra.mxu0 0.0
    %1077 = vmatprep.subr.mxu0 0.0
    %1078 = vmatpush1.msra.mxu0 0.0
    %1079 = vmatprep.subr.mxu0 0.0
    %1080 = vmatpush1.msra.mxu0 0.0
    %1081 = vmatprep.subr.mxu0 0.0
    %1082 = vmatpush1.msra.mxu0 0.0
    %1083 = vmatprep.subr.mxu0 0.0
    %1084 = vmatpush1.msra.mxu0 0.0
    %1085 = vmatprep.subr.mxu0 0.0
    %1086 = vmatpush1.msra.mxu0 0.0
    %1087 = vmatprep.subr.mxu0 0.0
    %1088 = vmatpush1.msra.mxu0 0.0
    %1089 = vmatprep.subr.mxu0 0.0
    %1090 = vmatpush1.msra.mxu0 0.0
    %1091 = vmatprep.subr.mxu0 0.0
    %1092 = vmatpush1.msra.mxu0 0.0
    %1093 = vmatprep.subr.mxu0 0.0
    %1094 = vmatpush1.msra.mxu0 0.0
    %1095 = vmatprep.subr.mxu0 0.0
    %1096 = vmatpush1.msra.mxu0 0.0
    %1097 = vmatprep.subr.mxu0 0.0
    %1098 = vmatpush1.msra.mxu0 0.0
    %1099 = vmatprep.subr.mxu0 0.0
    %1100 = vmatpush1.msra.mxu0 0.0
    %1101 = vmatprep.subr.mxu0 0.0
    %1102 = vmatpush1.msra.mxu0 0.0
    %1103 = vmatprep.subr.mxu0 0.0
    %1104 = vmatpush1.msra.mxu0 0.0
    %1105 = vmatprep.subr.mxu0 0.0
    %1106 = vmatpush1.msra.mxu0 0.0
    %1107 = vmatprep.subr.mxu0 0.0
    %1108 = vmatpush1.msra.mxu0 0.0
    %1109 = vmatprep.subr.mxu0 0.0
    %1110 = vmatpush1.msra.mxu0 0.0
    %1111 = vmatprep.subr.mxu0 0.0
    %1112 = vmatpush1.msra.mxu0 0.0
    %1113 = vmatprep.subr.mxu0 0.0
    %1114 = vmatpush1.msra.mxu0 0.0
    %1115 = vmatprep.subr.mxu0 0.0
    %1116 = vmatpush1.msra.mxu0 0.0
    %1117 = vmatprep.subr.mxu0 0.0
    %1118 = vmatpush1.msra.mxu0 0.0
    %1119 = vmatprep.subr.mxu0 0.0
    %1120 = vmatpush1.msra.mxu0 0.0
    %1121 = vmatprep.subr.mxu0 0.0
    %1122 = vmatpush1.msra.mxu0 0.0
    %1123 = vmatprep.subr.mxu0 0.0
    %1124 = vmatpush1.msra.mxu0 0.0
    %1125 = vmatprep.subr.mxu0 0.0
    %1126 = vmatpush1.msra.mxu0 0.0
    %1127 = vmatprep.mubr.f32.mxu0 0.0
    %1128 = vmatmul.mubr.f32.gmra.mrb[0].mxu0 %v1061
    %v1129 = vpop.f32.mrb[0].mxu0
    %v1130 = vadd.f32 0.0, %v1129
    %v1131 = vpop.f32.mrb[0].mxu0
    %1132 = vdwg.mxu0
    %v1133 = vadd.f32 %v1056, %v1130
    %v1134 = vadd.f32 %v1133, %v273
    %v1135 = vmax.f32 %v1134, 0.0
    %v1137 = vrot.slane %v1135, 1
    %v1138 = vsel %vm310, %v1137, 0
    %1140 = vmatprep.subr.mxu0 0.0
    %1141 = vmatpush1.msra.mxu0 %v300
    %1142 = vmatprep.subr.mxu0 0.0
    %1143 = vmatpush1.msra.mxu0 %v301
    %1144 = vmatprep.subr.mxu0 0.0
    %1145 = vmatpush1.msra.mxu0 %v302
    %1146 = vmatprep.subr.mxu0 0.0
    %1147 = vmatpush1.msra.mxu0 %v303
    %1148 = vmatprep.subr.mxu0 0.0
    %1149 = vmatpush1.msra.mxu0 %v304
    %1150 = vmatprep.subr.mxu0 0.0
    %1151 = vmatpush1.msra.mxu0 %v305
    %1152 = vmatprep.subr.mxu0 0.0
    %1153 = vmatpush1.msra.mxu0 %v306
    %1154 = vmatprep.subr.mxu0 0.0
    %1155 = vmatpush1.msra.mxu0 %v307
    %1156 = vmatprep.subr.mxu0 0.0
    %1157 = vmatpush1.msra.mxu0 0.0
    %1158 = vmatprep.subr.mxu0 0.0
    %1159 = vmatpush1.msra.mxu0 0.0
    %1160 = vmatprep.subr.mxu0 0.0
    %1161 = vmatpush1.msra.mxu0 0.0
    %1162 = vmatprep.subr.mxu0 0.0
    %1163 = vmatpush1.msra.mxu0 0.0
    %1164 = vmatprep.subr.mxu0 0.0
    %1165 = vmatpush1.msra.mxu0 0.0
    %1166 = vmatprep.subr.mxu0 0.0
    %1167 = vmatpush1.msra.mxu0 0.0
    %1168 = vmatprep.subr.mxu0 0.0
    %1169 = vmatpush1.msra.mxu0 0.0
    %1170 = vmatprep.subr.mxu0 0.0
    %1171 = vmatpush1.msra.mxu0 0.0
    %1172 = vmatprep.subr.mxu0 0.0
    %1173 = vmatpush1.msra.mxu0 0.0
    %1174 = vmatprep.subr.mxu0 0.0
    %1175 = vmatpush1.msra.mxu0 0.0
    %1176 = vmatprep.subr.mxu0 0.0
    %1177 = vmatpush1.msra.mxu0 0.0
    %1178 = vmatprep.subr.mxu0 0.0
    %1179 = vmatpush1.msra.mxu0 0.0
    %1180 = vmatprep.subr.mxu0 0.0
    %1181 = vmatpush1.msra.mxu0 0.0
    %1182 = vmatprep.subr.mxu0 0.0
    %1183 = vmatpush1.msra.mxu0 0.0
    %1184 = vmatprep.subr.mxu0 0.0
    %1185 = vmatpush1.msra.mxu0 0.0
    %1186 = vmatprep.subr.mxu0 0.0
    %1187 = vmatpush1.msra.mxu0 0.0
    %1188 = vmatprep.subr.mxu0 0.0
    %1189 = vmatpush1.msra.mxu0 0.0
    %1190 = vmatprep.subr.mxu0 0.0
    %1191 = vmatpush1.msra.mxu0 0.0
    %1192 = vmatprep.subr.mxu0 0.0
    %1193 = vmatpush1.msra.mxu0 0.0
    %1194 = vmatprep.subr.mxu0 0.0
    %1195 = vmatpush1.msra.mxu0 0.0
    %1196 = vmatprep.subr.mxu0 0.0
    %1197 = vmatpush1.msra.mxu0 0.0
    %1198 = vmatprep.subr.mxu0 0.0
    %1199 = vmatpush1.msra.mxu0 0.0
    %1200 = vmatprep.subr.mxu0 0.0
    %1201 = vmatpush1.msra.mxu0 0.0
    %1202 = vmatprep.subr.mxu0 0.0
    %1203 = vmatpush1.msra.mxu0 0.0
    %1204 = vmatprep.mubr.f32.mxu0 0.0
    %1205 = vmatmul.mubr.f32.gmra.mrb[0].mxu0 %v1138
    %v1206 = vpop.f32.mrb[0].mxu0
    %v1207 = vadd.f32 0.0, %v1206
    %v1208 = vpop.f32.mrb[0].mxu0
    %1209 = vdwg.mxu0
    %v1210 = vsel %vm310, %v1135, 0
    %1212 = vmatprep.subr.mxu0 0.0
    %1213 = vmatpush1.msra.mxu0 %v284
    %1214 = vmatprep.subr.mxu0 0.0
    %1215 = vmatpush1.msra.mxu0 %v285
    %1216 = vmatprep.subr.mxu0 0.0
    %1217 = vmatpush1.msra.mxu0 %v286
    %1218 = vmatprep.subr.mxu0 0.0
    %1219 = vmatpush1.msra.mxu0 %v287
    %1220 = vmatprep.subr.mxu0 0.0
    %1221 = vmatpush1.msra.mxu0 %v288
    %1222 = vmatprep.subr.mxu0 0.0
    %1223 = vmatpush1.msra.mxu0 %v289
    %1224 = vmatprep.subr.mxu0 0.0
    %1225 = vmatpush1.msra.mxu0 %v290
    %1226 = vmatprep.subr.mxu0 0.0
    %1227 = vmatpush1.msra.mxu0 %v291
    %1228 = vmatprep.subr.mxu0 0.0
    %1229 = vmatpush1.msra.mxu0 0.0
    %1230 = vmatprep.subr.mxu0 0.0
    %1231 = vmatpush1.msra.mxu0 0.0
    %1232 = vmatprep.subr.mxu0 0.0
    %1233 = vmatpush1.msra.mxu0 0.0
    %1234 = vmatprep.subr.mxu0 0.0
    %1235 = vmatpush1.msra.mxu0 0.0
    %1236 = vmatprep.subr.mxu0 0.0
    %1237 = vmatpush1.msra.mxu0 0.0
    %1238 = vmatprep.subr.mxu0 0.0
    %1239 = vmatpush1.msra.mxu0 0.0
    %1240 = vmatprep.subr.mxu0 0.0
    %1241 = vmatpush1.msra.mxu0 0.0
    %1242 = vmatprep.subr.mxu0 0.0
    %1243 = vmatpush1.msra.mxu0 0.0
    %1244 = vmatprep.subr.mxu0 0.0
    %1245 = vmatpush1.msra.mxu0 0.0
    %1246 = vmatprep.subr.mxu0 0.0
    %1247 = vmatpush1.msra.mxu0 0.0
    %1248 = vmatprep.subr.mxu0 0.0
    %1249 = vmatpush1.msra.mxu0 0.0
    %1250 = vmatprep.subr.mxu0 0.0
    %1251 = vmatpush1.msra.mxu0 0.0
    %1252 = vmatprep.subr.mxu0 0.0
    %1253 = vmatpush1.msra.mxu0 0.0
    %1254 = vmatprep.subr.mxu0 0.0
    %1255 = vmatpush1.msra.mxu0 0.0
    %1256 = vmatprep.subr.mxu0 0.0
    %1257 = vmatpush1.msra.mxu0 0.0
    %1258 = vmatprep.subr.mxu0 0.0
    %1259 = vmatpush1.msra.mxu0 0.0
    %1260 = vmatprep.subr.mxu0 0.0
    %1261 = vmatpush1.msra.mxu0 0.0
    %1262 = vmatprep.subr.mxu0 0.0
    %1263 = vmatpush1.msra.mxu0 0.0
    %1264 = vmatprep.subr.mxu0 0.0
    %1265 = vmatpush1.msra.mxu0 0.0
    %1266 = vmatprep.subr.mxu0 0.0
    %1267 = vmatpush1.msra.mxu0 0.0
    %1268 = vmatprep.subr.mxu0 0.0
    %1269 = vmatpush1.msra.mxu0 0.0
    %1270 = vmatprep.subr.mxu0 0.0
    %1271 = vmatpush1.msra.mxu0 0.0
    %1272 = vmatprep.subr.mxu0 0.0
    %1273 = vmatpush1.msra.mxu0 0.0
    %1274 = vmatprep.subr.mxu0 0.0
    %1275 = vmatpush1.msra.mxu0 0.0
    %1276 = vmatprep.mubr.f32.mxu0 0.0
    %1277 = vmatmul.mubr.f32.gmra.mrb[0].mxu0 %v1210
    %v1278 = vpop.f32.mrb[0].mxu0
    %v1279 = vadd.f32 %v1207, %v1278
    %v1280 = vpop.f32.mrb[0].mxu0
    %1281 = vdwg.mxu0
    %v1282 = vrot.slane %v1135, 2
    %v1283 = vsel %vm310, %v1282, 0
    %1285 = vmatprep.subr.mxu0 0.0
    %1286 = vmatpush1.msra.mxu0 %v463
    %1287 = vmatprep.subr.mxu0 0.0
    %1288 = vmatpush1.msra.mxu0 %v464
    %1289 = vmatprep.subr.mxu0 0.0
    %1290 = vmatpush1.msra.mxu0 %v465
    %1291 = vmatprep.subr.mxu0 0.0
    %1292 = vmatpush1.msra.mxu0 %v466
    %1293 = vmatprep.subr.mxu0 0.0
    %1294 = vmatpush1.msra.mxu0 %v467
    %1295 = vmatprep.subr.mxu0 0.0
    %1296 = vmatpush1.msra.mxu0 %v468
    %1297 = vmatprep.subr.mxu0 0.0
    %1298 = vmatpush1.msra.mxu0 %v469
    %1299 = vmatprep.subr.mxu0 0.0
    %1300 = vmatpush1.msra.mxu0 %v470
    %1301 = vmatprep.subr.mxu0 0.0
    %1302 = vmatpush1.msra.mxu0 0.0
    %1303 = vmatprep.subr.mxu0 0.0
    %1304 = vmatpush1.msra.mxu0 0.0
    %1305 = vmatprep.subr.mxu0 0.0
    %1306 = vmatpush1.msra.mxu0 0.0
    %1307 = vmatprep.subr.mxu0 0.0
    %1308 = vmatpush1.msra.mxu0 0.0
    %1309 = vmatprep.subr.mxu0 0.0
    %1310 = vmatpush1.msra.mxu0 0.0
    %1311 = vmatprep.subr.mxu0 0.0
    %1312 = vmatpush1.msra.mxu0 0.0
    %1313 = vmatprep.subr.mxu0 0.0
    %1314 = vmatpush1.msra.mxu0 0.0
    %1315 = vmatprep.subr.mxu0 0.0
    %1316 = vmatpush1.msra.mxu0 0.0
    %1317 = vmatprep.subr.mxu0 0.0
    %1318 = vmatpush1.msra.mxu0 0.0
    %1319 = vmatprep.subr.mxu0 0.0
    %1320 = vmatpush1.msra.mxu0 0.0
    %1321 = vmatprep.subr.mxu0 0.0
    %1322 = vmatpush1.msra.mxu0 0.0
    %1323 = vmatprep.subr.mxu0 0.0
    %1324 = vmatpush1.msra.mxu0 0.0
    %1325 = vmatprep.subr.mxu0 0.0
    %1326 = vmatpush1.msra.mxu0 0.0
    %1327 = vmatprep.subr.mxu0 0.0
    %1328 = vmatpush1.msra.mxu0 0.0
    %1329 = vmatprep.subr.mxu0 0.0
    %1330 = vmatpush1.msra.mxu0 0.0
    %1331 = vmatprep.subr.mxu0 0.0
    %1332 = vmatpush1.msra.mxu0 0.0
    %1333 = vmatprep.subr.mxu0 0.0
    %1334 = vmatpush1.msra.mxu0 0.0
    %1335 = vmatprep.subr.mxu0 0.0
    %1336 = vmatpush1.msra.mxu0 0.0
    %1337 = vmatprep.subr.mxu0 0.0
    %1338 = vmatpush1.msra.mxu0 0.0
    %1339 = vmatprep.subr.mxu0 0.0
    %1340 = vmatpush1.msra.mxu0 0.0
    %1341 = vmatprep.subr.mxu0 0.0
    %1342 = vmatpush1.msra.mxu0 0.0
    %1343 = vmatprep.subr.mxu0 0.0
    %1344 = vmatpush1.msra.mxu0 0.0
    %1345 = vmatprep.subr.mxu0 0.0
    %1346 = vmatpush1.msra.mxu0 0.0
    %1347 = vmatprep.subr.mxu0 0.0
    %1348 = vmatpush1.msra.mxu0 0.0
    %1349 = vmatprep.mubr.f32.mxu0 0.0
    %1350 = vmatmul.mubr.f32.gmra.mrb[0].mxu0 %v1283
    %v1351 = vpop.f32.mrb[0].mxu0
    %v1352 = vadd.f32 0.0, %v1351
    %v1353 = vpop.f32.mrb[0].mxu0
    %1354 = vdwg.mxu0
    %v1355 = vadd.f32 %v1279, %v1352
    %v1356 = vadd.f32 %v1355, %v548
    %v1357 = vmax.f32 %v1356, 0.0
    %v1359 = vrot.slane %v1357, 1
    %v1360 = vsel %vm310, %v1359, 0
    %1362 = vmatprep.subr.mxu0 0.0
    %1363 = vmatpush1.msra.mxu0 %v575
    %1364 = vmatprep.subr.mxu0 0.0
    %1365 = vmatpush1.msra.mxu0 %v576
    %1366 = vmatprep.subr.mxu0 0.0
    %1367 = vmatpush1.msra.mxu0 %v577
    %1368 = vmatprep.subr.mxu0 0.0
    %1369 = vmatpush1.msra.mxu0 %v578
    %1370 = vmatprep.subr.mxu0 0.0
    %1371 = vmatpush1.msra.mxu0 %v579
    %1372 = vmatprep.subr.mxu0 0.0
    %1373 = vmatpush1.msra.mxu0 %v580
    %1374 = vmatprep.subr.mxu0 0.0
    %1375 = vmatpush1.msra.mxu0 %v581
    %1376 = vmatprep.subr.mxu0 0.0
    %1377 = vmatpush1.msra.mxu0 %v582
    %1378 = vmatprep.subr.mxu0 0.0
    %1379 = vmatpush1.msra.mxu0 0.0
    %1380 = vmatprep.subr.mxu0 0.0
    %1381 = vmatpush1.msra.mxu0 0.0
    %1382 = vmatprep.subr.mxu0 0.0
    %1383 = vmatpush1.msra.mxu0 0.0
    %1384 = vmatprep.subr.mxu0 0.0
    %1385 = vmatpush1.msra.mxu0 0.0
    %1386 = vmatprep.subr.mxu0 0.0
    %1387 = vmatpush1.msra.mxu0 0.0
    %1388 = vmatprep.subr.mxu0 0.0
    %1389 = vmatpush1.msra.mxu0 0.0
    %1390 = vmatprep.subr.mxu0 0.0
    %1391 = vmatpush1.msra.mxu0 0.0
    %1392 = vmatprep.subr.mxu0 0.0
    %1393 = vmatpush1.msra.mxu0 0.0
    %1394 = vmatprep.subr.mxu0 0.0
    %1395 = vmatpush1.msra.mxu0 0.0
    %1396 = vmatprep.subr.mxu0 0.0
    %1397 = vmatpush1.msra.mxu0 0.0
    %1398 = vmatprep.subr.mxu0 0.0
    %1399 = vmatpush1.msra.mxu0 0.0
    %1400 = vmatprep.subr.mxu0 0.0
    %1401 = vmatpush1.msra.mxu0 0.0
    %1402 = vmatprep.subr.mxu0 0.0
    %1403 = vmatpush1.msra.mxu0 0.0
    %1404 = vmatprep.subr.mxu0 0.0
    %1405 = vmatpush1.msra.mxu0 0.0
    %1406 = vmatprep.subr.mxu0 0.0
    %1407 = vmatpush1.msra.mxu0 0.0
    %1408 = vmatprep.subr.mxu0 0.0
    %1409 = vmatpush1.msra.mxu0 0.0
    %1410 = vmatprep.subr.mxu0 0.0
    %1411 = vmatpush1.msra.mxu0 0.0
    %1412 = vmatprep.subr.mxu0 0.0
    %1413 = vmatpush1.msra.mxu0 0.0
    %1414 = vmatprep.subr.mxu0 0.0
    %1415 = vmatpush1.msra.mxu0 0.0
    %1416 = vmatprep.subr.mxu0 0.0
    %1417 = vmatpush1.msra.mxu0 0.0
    %1418 = vmatprep.subr.mxu0 0.0
    %1419 = vmatpush1.msra.mxu0 0.0
    %1420 = vmatprep.subr.mxu0 0.0
    %1421 = vmatpush1.msra.mxu0 0.0
    %1422 = vmatprep.subr.mxu0 0.0
    %1423 = vmatpush1.msra.mxu0 0.0
    %1424 = vmatprep.subr.mxu0 0.0
    %1425 = vmatpush1.msra.mxu0 0.0
    %1426 = vmatprep.mubr.f32.mxu0 0.0
    %1427 = vmatmul.mubr.f32.gmra.mrb[0].mxu0 %v1360
    %v1428 = vpop.f32.mrb[0].mxu0
    %v1429 = vadd.f32 0.0, %v1428
    %v1430 = vpop.f32.mrb[0].mxu0
    %1431 = vdwg.mxu0
    %v1432 = vsel %vm310, %v1357, 0
    %1434 = vmatprep.subr.mxu0 0.0
    %1435 = vmatpush1.msra.mxu0 %v559
    %1436 = vmatprep.subr.mxu0 0.0
    %1437 = vmatpush1.msra.mxu0 %v560
    %1438 = vmatprep.subr.mxu0 0.0
    %1439 = vmatpush1.msra.mxu0 %v561
    %1440 = vmatprep.subr.mxu0 0.0
    %1441 = vmatpush1.msra.mxu0 %v562
    %1442 = vmatprep.subr.mxu0 0.0
    %1443 = vmatpush1.msra.mxu0 %v563
    %1444 = vmatprep.subr.mxu0 0.0
    %1445 = vmatpush1.msra.mxu0 %v564
    %1446 = vmatprep.subr.mxu0 0.0
    %1447 = vmatpush1.msra.mxu0 %v565
    %1448 = vmatprep.subr.mxu0 0.0
    %1449 = vmatpush1.msra.mxu0 %v566
    %1450 = vmatprep.subr.mxu0 0.0
    %1451 = vmatpush1.msra.mxu0 0.0
    %1452 = vmatprep.subr.mxu0 0.0
    %1453 = vmatpush1.msra.mxu0 0.0
    %1454 = vmatprep.subr.mxu0 0.0
    %1455 = vmatpush1.msra.mxu0 0.0
    %1456 = vmatprep.subr.mxu0 0.0
    %1457 = vmatpush1.msra.mxu0 0.0
    %1458 = vmatprep.subr.mxu0 0.0
    %1459 = vmatpush1.msra.mxu0 0.0
    %1460 = vmatprep.subr.mxu0 0.0
    %1461 = vmatpush1.msra.mxu0 0.0
    %1462 = vmatprep.subr.mxu0 0.0
    %1463 = vmatpush1.msra.mxu0 0.0
    %1464 = vmatprep.subr.mxu0 0.0
    %1465 = vmatpush1.msra.mxu0 0.0
    %1466 = vmatprep.subr.mxu0 0.0
    %1467 = vmatpush1.msra.mxu0 0.0
    %1468 = vmatprep.subr.mxu0 0.0
    %1469 = vmatpush1.msra.mxu0 0.0
    %1470 = vmatprep.subr.mxu0 0.0
    %1471 = vmatpush1.msra.mxu0 0.0
    %1472 = vmatprep.subr.mxu0 0.0
    %1473 = vmatpush1.msra.mxu0 0.0
    %1474 = vmatprep.subr.mxu0 0.0
    %1475 = vmatpush1.msra.mxu0 0.0
    %1476 = vmatprep.subr.mxu0 0.0
    %1477 = vmatpush1.msra.mxu0 0.0
    %1478 = vmatprep.subr.mxu0 0.0
    %1479 = vmatpush1.msra.mxu0 0.0
    %1480 = vmatprep.subr.mxu0 0.0
    %1481 = vmatpush1.msra.mxu0 0.0
    %1482 = vmatprep.subr.mxu0 0.0
    %1483 = vmatpush1.msra.mxu0 0.0
    %1484 = vmatprep.subr.mxu0 0.0
    %1485 = vmatpush1.msra.mxu0 0.0
    %1486 = vmatprep.subr.mxu0 0.0
    %1487 = vmatpush1.msra.mxu0 0.0
    %1488 = vmatprep.subr.mxu0 0.0
    %1489 = vmatpush1.msra.mxu0 0.0
    %1490 = vmatprep.subr.mxu0 0.0
    %1491 = vmatpush1.msra.mxu0 0.0
    %1492 = vmatprep.subr.mxu0 0.0
    %1493 = vmatpush1.msra.mxu0 0.0
    %1494 = vmatprep.subr.mxu0 0.0
    %1495 = vmatpush1.msra.mxu0 0.0
    %1496 = vmatprep.subr.mxu0 0.0
    %1497 = vmatpush1.msra.mxu0 0.0
    %1498 = vmatprep.mubr.f32.mxu0 0.0
    %1499 = vmatmul.mubr.f32.gmra.mrb[0].mxu0 %v1432
    %v1500 = vpop.f32.mrb[0].mxu0
    %v1501 = vadd.f32 %v1429, %v1500
    %v1502 = vpop.f32.mrb[0].mxu0
    %1503 = vdwg.mxu0
    %v1504 = vrot.slane %v1357, 2
    %v1505 = vsel %vm310, %v1504, 0
    %1507 = vmatprep.subr.mxu0 0.0
    %1508 = vmatpush1.msra.mxu0 %v737
    %1509 = vmatprep.subr.mxu0 0.0
    %1510 = vmatpush1.msra.mxu0 %v738
    %1511 = vmatprep.subr.mxu0 0.0
    %1512 = vmatpush1.msra.mxu0 %v739
    %1513 = vmatprep.subr.mxu0 0.0
    %1514 = vmatpush1.msra.mxu0 %v740
    %1515 = vmatprep.subr.mxu0 0.0
    %1516 = vmatpush1.msra.mxu0 %v741
    %1517 = vmatprep.subr.mxu0 0.0
    %1518 = vmatpush1.msra.mxu0 %v742
    %1519 = vmatprep.subr.mxu0 0.0
    %1520 = vmatpush1.msra.mxu0 %v743
    %1521 = vmatprep.subr.mxu0 0.0
    %1522 = vmatpush1.msra.mxu0 %v744
    %1523 = vmatprep.subr.mxu0 0.0
    %1524 = vmatpush1.msra.mxu0 0.0
    %1525 = vmatprep.subr.mxu0 0.0
    %1526 = vmatpush1.msra.mxu0 0.0
    %1527 = vmatprep.subr.mxu0 0.0
    %1528 = vmatpush1.msra.mxu0 0.0
    %1529 = vmatprep.subr.mxu0 0.0
    %1530 = vmatpush1.msra.mxu0 0.0
    %1531 = vmatprep.subr.mxu0 0.0
    %1532 = vmatpush1.msra.mxu0 0.0
    %1533 = vmatprep.subr.mxu0 0.0
    %1534 = vmatpush1.msra.mxu0 0.0
    %1535 = vmatprep.subr.mxu0 0.0
    %1536 = vmatpush1.msra.mxu0 0.0
    %1537 = vmatprep.subr.mxu0 0.0
    %1538 = vmatpush1.msra.mxu0 0.0
    %1539 = vmatprep.subr.mxu0 0.0
    %1540 = vmatpush1.msra.mxu0 0.0
    %1541 = vmatprep.subr.mxu0 0.0
    %1542 = vmatpush1.msra.mxu0 0.0
    %1543 = vmatprep.subr.mxu0 0.0
    %1544 = vmatpush1.msra.mxu0 0.0
    %1545 = vmatprep.subr.mxu0 0.0
    %1546 = vmatpush1.msra.mxu0 0.0
    %1547 = vmatprep.subr.mxu0 0.0
    %1548 = vmatpush1.msra.mxu0 0.0
    %1549 = vmatprep.subr.mxu0 0.0
    %1550 = vmatpush1.msra.mxu0 0.0
    %1551 = vmatprep.subr.mxu0 0.0
    %1552 = vmatpush1.msra.mxu0 0.0
    %1553 = vmatprep.subr.mxu0 0.0
    %1554 = vmatpush1.msra.mxu0 0.0
    %1555 = vmatprep.subr.mxu0 0.0
    %1556 = vmatpush1.msra.mxu0 0.0
    %1557 = vmatprep.subr.mxu0 0.0
    %1558 = vmatpush1.msra.mxu0 0.0
    %1559 = vmatprep.subr.mxu0 0.0
    %1560 = vmatpush1.msra.mxu0 0.0
    %1561 = vmatprep.subr.mxu0 0.0
    %1562 = vmatpush1.msra.mxu0 0.0
    %1563 = vmatprep.subr.mxu0 0.0
    %1564 = vmatpush1.msra.mxu0 0.0
    %1565 = vmatprep.subr.mxu0 0.0
    %1566 = vmatpush1.msra.mxu0 0.0
    %1567 = vmatprep.subr.mxu0 0.0
    %1568 = vmatpush1.msra.mxu0 0.0
    %1569 = vmatprep.subr.mxu0 0.0
    %1570 = vmatpush1.msra.mxu0 0.0
    %1571 = vmatprep.mubr.f32.mxu0 0.0
    %1572 = vmatmul.mubr.f32.gmra.mrb[0].mxu0 %v1505
    %v1573 = vpop.f32.mrb[0].mxu0
    %v1574 = vadd.f32 0.0, %v1573
    %v1575 = vpop.f32.mrb[0].mxu0
    %1576 = vdwg.mxu0
    %v1577 = vadd.f32 %v1501, %v1574
    %v1578 = vrot.slane %v1357, 3
    %v1579 = vsel %vm310, %v1578, 0
    %1581 = vmatprep.subr.mxu0 0.0
    %1582 = vmatpush1.msra.mxu0 %v827
    %1583 = vmatprep.subr.mxu0 0.0
    %1584 = vmatpush1.msra.mxu0 %v828
    %1585 = vmatprep.subr.mxu0 0.0
    %1586 = vmatpush1.msra.mxu0 %v829
    %1587 = vmatprep.subr.mxu0 0.0
    %1588 = vmatpush1.msra.mxu0 %v830
    %1589 = vmatprep.subr.mxu0 0.0
    %1590 = vmatpush1.msra.mxu0 %v831
    %1591 = vmatprep.subr.mxu0 0.0
    %1592 = vmatpush1.msra.mxu0 %v832
    %1593 = vmatprep.subr.mxu0 0.0
    %1594 = vmatpush1.msra.mxu0 %v833
    %1595 = vmatprep.subr.mxu0 0.0
    %1596 = vmatpush1.msra.mxu0 %v834
    %1597 = vmatprep.subr.mxu0 0.0
    %1598 = vmatpush1.msra.mxu0 0.0
    %1599 = vmatprep.subr.mxu0 0.0
    %1600 = vmatpush1.msra.mxu0 0.0
    %1601 = vmatprep.subr.mxu0 0.0
    %1602 = vmatpush1.msra.mxu0 0.0
    %1603 = vmatprep.subr.mxu0 0.0
    %1604 = vmatpush1.msra.mxu0 0.0
    %1605 = vmatprep.subr.mxu0 0.0
    %1606 = vmatpush1.msra.mxu0 0.0
    %1607 = vmatprep.subr.mxu0 0.0
    %1608 = vmatpush1.msra.mxu0 0.0
    %1609 = vmatprep.subr.mxu0 0.0
    %1610 = vmatpush1.msra.mxu0 0.0
    %1611 = vmatprep.subr.mxu0 0.0
    %1612 = vmatpush1.msra.mxu0 0.0
    %1613 = vmatprep.subr.mxu0 0.0
    %1614 = vmatpush1.msra.mxu0 0.0
    %1615 = vmatprep.subr.mxu0 0.0
    %1616 = vmatpush1.msra.mxu0 0.0
    %1617 = vmatprep.subr.mxu0 0.0
    %1618 = vmatpush1.msra.mxu0 0.0
    %1619 = vmatprep.subr.mxu0 0.0
    %1620 = vmatpush1.msra.mxu0 0.0
    %1621 = vmatprep.subr.mxu0 0.0
    %1622 = vmatpush1.msra.mxu0 0.0
    %1623 = vmatprep.subr.mxu0 0.0
    %1624 = vmatpush1.msra.mxu0 0.0
    %1625 = vmatprep.subr.mxu0 0.0
    %1626 = vmatpush1.msra.mxu0 0.0
    %1627 = vmatprep.subr.mxu0 0.0
    %1628 = vmatpush1.msra.mxu0 0.0
    %1629 = vmatprep.subr.mxu0 0.0
    %1630 = vmatpush1.msra.mxu0 0.0
    %1631 = vmatprep.subr.mxu0 0.0
    %1632 = vmatpush1.msra.mxu0 0.0
    %1633 = vmatprep.subr.mxu0 0.0
    %1634 = vmatpush1.msra.mxu0 0.0
    %1635 = vmatprep.subr.mxu0 0.0
    %1636 = vmatpush1.msra.mxu0 0.0
    %1637 = vmatprep.subr.mxu0 0.0
    %1638 = vmatpush1.msra.mxu0 0.0
    %1639 = vmatprep.subr.mxu0 0.0
    %1640 = vmatpush1.msra.mxu0 0.0
    %1641 = vmatprep.subr.mxu0 0.0
    %1642 = vmatpush1.msra.mxu0 0.0
    %1643 = vmatprep.subr.mxu0 0.0
    %1644 = vmatpush1.msra.mxu0 0.0
    %1645 = vmatprep.mubr.f32.mxu0 0.0
    %1646 = vmatmul.mubr.f32.gmra.mrb[0].mxu0 %v1579
    %v1647 = vpop.f32.mrb[0].mxu0
    %v1648 = vadd.f32 0.0, %v1647
    %v1649 = vpop.f32.mrb[0].mxu0
    %1650 = vdwg.mxu0
    %v1651 = vadd.f32 %v1577, %v1648
    %v1652 = vadd.f32 %v1651, %v30
    %v1653 = vmax.f32 %v1652, 0.0
    %v1655 = vrot.slane %v1653, 7
    %vm1657 = vcmask 1040384
    %v1658 = vsel %vm1657, %v910, %v1655
    %v1659 = vld [vmem:[#allocation2 + $0xf8] sm:$0xf]
    %v1660 = vld [vmem:[#allocation2 + $0xfc] sm:$0xf]
    %v1661 = vld [vmem:[#allocation2 + $0x100] sm:$0xf]
    %v1662 = vld [vmem:[#allocation2 + $0x104] sm:$0xf]
    %v1663 = vld [vmem:[#allocation2 + $0x108] sm:$0xf]
    %v1664 = vld [vmem:[#allocation2 + $0x10c] sm:$0xf]
    %v1665 = vld [vmem:[#allocation2 + $0x110] sm:$0xf]
    %v1666 = vld [vmem:[#allocation2 + $0x114] sm:$0xf]
    %v1667 = vld [vmem:[#allocation2 + $0x118] sm:$0xf]
    %v1668 = vld [vmem:[#allocation2 + $0x11c] sm:$0xf]
    %v1669 = vld [vmem:[#allocation2 + $0x120] sm:$0xf]
    %v1670 = vld [vmem:[#allocation2 + $0x124] sm:$0xf]
    %v1671 = vld [vmem:[#allocation2 + $0x128] sm:$0xf]
    %v1672 = vld [vmem:[#allocation2 + $0x12c] sm:$0xf]
    %v1673 = vld [vmem:[#allocation2 + $0x130] sm:$0xf]
    %v1674 = vld [vmem:[#allocation2 + $0x134] sm:$0xf]
    %v1675 = vunpack.c.l.bf16 %v1659
    %v1676 = vunpack.c.l.bf16 %v1660
    %v1677 = vunpack.c.l.bf16 %v1661
    %v1678 = vunpack.c.l.bf16 %v1662
    %v1679 = vunpack.c.l.bf16 %v1663
    %v1680 = vunpack.c.l.bf16 %v1664
    %v1681 = vunpack.c.l.bf16 %v1665
    %v1682 = vunpack.c.l.bf16 %v1666
    %v1683 = vunpack.c.l.bf16 %v1667
    %v1684 = vunpack.c.l.bf16 %v1668
    %v1685 = vunpack.c.l.bf16 %v1669
    %v1686 = vunpack.c.l.bf16 %v1670
    %v1687 = vunpack.c.l.bf16 %v1671
    %v1688 = vunpack.c.l.bf16 %v1672
    %v1689 = vunpack.c.l.bf16 %v1673
    %v1690 = vunpack.c.l.bf16 %v1674
    %v1691 = vlaneseq
    %v1692 = vshrl.u32 %v1691, 7
    %v1693 = vsub.s32 0, %v1692
    %v1694 = vrot.slane %v31, %v1693
    %1695 = vmatprep.subr.mxu0 0.0
    %1696 = vmatpush1.msra.mxu0 %v1675
    %1697 = vmatprep.subr.mxu0 0.0
    %1698 = vmatpush1.msra.mxu0 %v1676
    %1699 = vmatprep.subr.mxu0 0.0
    %1700 = vmatpush1.msra.mxu0 %v1677
    %1701 = vmatprep.subr.mxu0 0.0
    %1702 = vmatpush1.msra.mxu0 %v1678
    %1703 = vmatprep.subr.mxu0 0.0
    %1704 = vmatpush1.msra.mxu0 %v1679
    %1705 = vmatprep.subr.mxu0 0.0
    %1706 = vmatpush1.msra.mxu0 %v1680
    %1707 = vmatprep.subr.mxu0 0.0
    %1708 = vmatpush1.msra.mxu0 %v1681
    %1709 = vmatprep.subr.mxu0 0.0
    %1710 = vmatpush1.msra.mxu0 %v1682
    %1711 = vmatprep.subr.mxu0 0.0
    %1712 = vmatpush1.msra.mxu0 %v1683
    %1713 = vmatprep.subr.mxu0 0.0
    %1714 = vmatpush1.msra.mxu0 %v1684
    %1715 = vmatprep.subr.mxu0 0.0
    %1716 = vmatpush1.msra.mxu0 %v1685
    %1717 = vmatprep.subr.mxu0 0.0
    %1718 = vmatpush1.msra.mxu0 %v1686
    %1719 = vmatprep.subr.mxu0 0.0
    %1720 = vmatpush1.msra.mxu0 %v1687
    %1721 = vmatprep.subr.mxu0 0.0
    %1722 = vmatpush1.msra.mxu0 %v1688
    %1723 = vmatprep.subr.mxu0 0.0
    %1724 = vmatpush1.msra.mxu0 %v1689
    %1725 = vmatprep.subr.mxu0 0.0
    %1726 = vmatpush1.msra.mxu0 %v1690
    %1727 = vmatprep.subr.mxu0 0.0
    %1728 = vmatpush1.msra.mxu0 0.0
    %1729 = vmatprep.subr.mxu0 0.0
    %1730 = vmatpush1.msra.mxu0 0.0
    %1731 = vmatprep.subr.mxu0 0.0
    %1732 = vmatpush1.msra.mxu0 0.0
    %1733 = vmatprep.subr.mxu0 0.0
    %1734 = vmatpush1.msra.mxu0 0.0
    %1735 = vmatprep.subr.mxu0 0.0
    %1736 = vmatpush1.msra.mxu0 0.0
    %1737 = vmatprep.subr.mxu0 0.0
    %1738 = vmatpush1.msra.mxu0 0.0
    %1739 = vmatprep.subr.mxu0 0.0
    %1740 = vmatpush1.msra.mxu0 0.0
    %1741 = vmatprep.subr.mxu0 0.0
    %1742 = vmatpush1.msra.mxu0 0.0
    %1743 = vmatprep.subr.mxu0 0.0
    %1744 = vmatpush1.msra.mxu0 0.0
    %1745 = vmatprep.subr.mxu0 0.0
    %1746 = vmatpush1.msra.mxu0 0.0
    %1747 = vmatprep.subr.mxu0 0.0
    %1748 = vmatpush1.msra.mxu0 0.0
    %1749 = vmatprep.subr.mxu0 0.0
    %1750 = vmatpush1.msra.mxu0 0.0
    %1751 = vmatprep.subr.mxu0 0.0
    %1752 = vmatpush1.msra.mxu0 0.0
    %1753 = vmatprep.subr.mxu0 0.0
    %1754 = vmatpush1.msra.mxu0 0.0
    %1755 = vmatprep.subr.mxu0 0.0
    %1756 = vmatpush1.msra.mxu0 0.0
    %1757 = vmatprep.subr.mxu0 0.0
    %1758 = vmatpush1.msra.mxu0 0.0
    %1759 = vmatprep.mubr.f32.mxu0 0.0
    %1760 = vmatmul.mubr.f32.gmra.mrb[0].mxu0 %v1658
    %v1761 = vpop.f32.mrb[0].mxu0
    %v1762 = vadd.f32 %v1694, %v1761
    %v1763 = vpop.f32.mrb[0].mxu0
    %1764 = vdwg.mxu0
    %v1765 = vmax.f32 %v1762, 0.0
    %v1766 = vlaneseq
    %v1767 = vshrl.u32 %v1766, 7
    %v1768 = vsub.s32 0, %v1767
    %v1769 = vrot.slane %v33, %v1768
    %v1770 = vmul.f32 %v1765, %v1769
    %vm1771 = vcmask 254976
    %v1772 = vsel %vm1771, %v1770, 0.0
    %1773 = vadd.xlane.f32.xlu0 %v1772
    %v1774 = vpop.xlane.xlu0 %1773
    %v1775 = vlaneseq
    %v1776 = vshrl.u32 %v1775, 7
    %v1777 = vsub.s32 0, %v1776
    %v1778 = vrot.slane %v32, %v1777
    %v1779 = vadd.f32 %v1774, %v1778
    %v1780 = vmax.f32 %v1779, 0.0
    %1782 = vset.pattern.permute.xlu0 0
    %1783 = vperm.xlu0 %1782, %v1780
    %v1784 = vpop.permute.xlu0 %1783
    %1786 = vst [vmem:[%s3] sm:$0x3] %v1784
    // Predicated region
    $region18: #{cnn5_forward.1} parent=1 // pred_check
      _
    $region19: #{cnn5_forward.1} parent=1 // pred_check_branch
      %1788 = sbr.rel (0) target = $region21
    $region20: #{cnn5_forward.1} parent=1 // pred_region
      _
    $region21: #{cnn5_forward.1} parent=1 // pred_fallthru
      _
    // Predicated region
    $region22: #{cnn5_forward.1} parent=1 // pred_check
      _
    $region23: #{cnn5_forward.1} parent=1 // pred_check_branch
      %1790 = sbr.rel (0) target = $region25
    $region24: #{cnn5_forward.1} parent=1 // pred_region
      _
    $region25: #{cnn5_forward.1} parent=1 // pred_fallthru
      _
    %1791 = vsyncpa [#allocation3], 1

</llo_original>
